<compile_context>
chip_gen: v7x
topology: tpu7x:2x2x1
jax: 0.10.0
libtpu: 0.0.40
codegen_flags: <defaults>
</compile_context>

<pallas_src>
import functools

import numpy as np
import jax
import jax.numpy as jnp
from jax.experimental import pallas as pl
from jax.experimental.pallas import tpu as pltpu


# ---------------- config consistent with BasicDQCNN ----------------
STATE_SIZE = 4                  # spatial size must equal state_size for Flatten
INPUT_NEURONS = 4
HIDDEN_NEURONS = (16, 16)
OUTPUT_NEURONS = 8
BATCH = 256                     # filled MXU rows; multiple of TM
TM = 128                        # batch rows per grid step
LANE = 128
BN_EPS = 1e-5


def _round_up(n, m):
    return ((n + m - 1) // m) * m


# ---------------- host-side parameter lowering (done ONCE) ----------------
def conv2d_same_as_matrix(weight, bias, S):
    """Stride-1 'same' Conv2d (PyTorch cross-correlation; asymmetric padding for
    even kernels: pad_before=(k-1)//2, pad_after=k//2) as a dense matrix over
    the (c, h, w)-flattened input.

    weight: (Cout, Cin, k, k), bias: (Cout,)
    returns M: (Cin*S*S, Cout*S*S), b: (Cout*S*S,)
    """
    weight = np.asarray(weight, np.float32)
    bias = np.asarray(bias, np.float32)
    Cout, Cin, k, _ = weight.shape
    pad = (k - 1) // 2
    M = np.zeros((Cin, S, S, Cout, S, S), np.float32)
    for kh in range(k):
        for kw in range(k):
            for ho in range(S):
                hi = ho + kh - pad
                if hi < 0 or hi >= S:
                    continue
                for wo in range(S):
                    wi = wo + kw - pad
                    if wi < 0 or wi >= S:
                        continue
                    # y[b,co,ho,wo] += x[b,ci,hi,wi] * w[co,ci,kh,kw]
                    M[:, hi, wi, :, ho, wo] += weight[:, :, kh, kw].T
    b = np.repeat(bias, S * S)
    return M.reshape(Cin * S * S, Cout * S * S), b


def fold_bn_conv(w, b, gamma, beta, mean, var, eps):
    """Fold eval-mode BatchNorm2d into the preceding conv weights/bias."""
    w = np.asarray(w, np.float32)
    b = np.asarray(b, np.float32)
    scale = np.asarray(gamma, np.float32) / np.sqrt(np.asarray(var, np.float32) + eps)
    w_f = w * scale[:, None, None, None]
    b_f = (b - np.asarray(mean, np.float32)) * scale + np.asarray(beta, np.float32)
    return w_f, b_f


def prepare_mats(params, state_size, lane=LANE):
    """Fold BN, lower convs to dense matrices, zero-pad to lane-dense shapes.

    Returns a flat tuple of device arrays (W1, b1, ..., Wfc1, bfc1, Wfc2, bfc2),
    biases reshaped to (1, N).  Pure host work; call once and reuse.
    """
    S = state_size
    mats = []
    for (w, b, gamma, beta, mean, var) in params["convs"]:
        wf, bf = fold_bn_conv(w, b, gamma, beta, mean, var, BN_EPS)
        mats.append(conv2d_same_as_matrix(wf, bf, S))

    # fc1 with BatchNorm1d folded in (BN before ReLU).
    w1, b1 = params["fc1"]
    g, bt, mu, vr = params["bn1d"]
    scale = np.asarray(g, np.float32) / np.sqrt(np.asarray(vr, np.float32) + BN_EPS)
    wf1 = np.asarray(w1, np.float32) * scale[None, :]
    bf1 = (np.asarray(b1, np.float32) - np.asarray(mu, np.float32)) * scale \
        + np.asarray(bt, np.float32)
    mats.append((wf1, bf1))

    w2, b2 = params["fc2"]
    mats.append((np.asarray(w2, np.float32), np.asarray(b2, np.float32)))

    # Zero-pad: first-layer K and every layer's N up to multiples of 128, with
    # each layer's row count matching the previous layer's padded column count.
    # Padded rows/cols are zeros (and padded biases are zero), so the live
    # output lanes are bit-identical to the unpadded computation.
    padded = []
    prev_cols = None
    for W, b in mats:
        rows, cols = W.shape
        rows_target = _round_up(rows, lane) if prev_cols is None else prev_cols
        cols_target = _round_up(cols, lane)
        Wp = np.pad(W, ((0, rows_target - rows), (0, cols_target - cols)))
        bp = np.pad(np.asarray(b, np.float32), (0, cols_target - cols))
        padded.append(jnp.asarray(Wp))
        padded.append(jnp.asarray(bp.reshape(1, -1)))
        prev_cols = cols_target
    return tuple(padded)


# ---------------- synthetic parameters (same shapes as BasicDQCNN) ----------------
def init_params(key, input_neurons, hidden_neurons, output_neurons, state_size):
    convs = []
    chans = (input_neurons,) + tuple(hidden_neurons)
    ksizes = (3,) + (2,) * (len(hidden_neurons) - 1)   # input_block k=3, hidden k=2
    for li, k in enumerate(ksizes):
        cin, cout = chans[li], chans[li + 1]
        key, kw, kb, kg, kbe, km, kv = jax.random.split(key, 7)
        w = np.asarray(jax.random.normal(kw, (cout, cin, k, k), jnp.float32)) / np.sqrt(cin * k * k)
        b = np.asarray(jax.random.normal(kb, (cout,), jnp.float32)) * 0.01
        gamma = 1.0 + 0.1 * np.asarray(jax.random.normal(kg, (cout,), jnp.float32))
        beta = 0.1 * np.asarray(jax.random.normal(kbe, (cout,), jnp.float32))
        mean = 0.1 * np.asarray(jax.random.normal(km, (cout,), jnp.float32))
        var = 0.5 + np.abs(np.asarray(jax.random.normal(kv, (cout,), jnp.float32)))
        convs.append((w, b, gamma, beta, mean, var))

    flat_in = hidden_neurons[-1] * state_size ** 2
    flat_mid = hidden_neurons[-1] // 2
    key, k1, k2, kg, kbe, km, kv, k3, k4 = jax.random.split(key, 9)
    fc1 = (np.asarray(jax.random.normal(k1, (flat_in, flat_mid), jnp.float32)) / np.sqrt(flat_in),
           np.asarray(jax.random.normal(k2, (flat_mid,), jnp.float32)) * 0.01)
    bn1d = (1.0 + 0.1 * np.asarray(jax.random.normal(kg, (flat_mid,), jnp.float32)),
            0.1 * np.asarray(jax.random.normal(kbe, (flat_mid,), jnp.float32)),
            0.1 * np.asarray(jax.random.normal(km, (flat_mid,), jnp.float32)),
            0.5 + np.abs(np.asarray(jax.random.normal(kv, (flat_mid,), jnp.float32))))
    fc2 = (np.asarray(jax.random.normal(k3, (flat_mid, output_neurons), jnp.float32)) / np.sqrt(flat_mid),
           np.asarray(jax.random.normal(k4, (output_neurons,), jnp.float32)) * 0.01)
    return {"convs": convs, "fc1": fc1, "bn1d": bn1d, "fc2": fc2}


# ---------------- Pallas kernel + wrapper ----------------
def dqcnn_forward_pallas(x_nchw, mats, *, out_neurons):
    """x_nchw: (B, C, S, S) float; mats: flat tuple from prepare_mats()."""
    B = x_nchw.shape[0]
    k_pad = mats[0].shape[0]          # padded input width (multiple of 128)
    n_pad = mats[-2].shape[1]         # padded output width (multiple of 128)
    n_layers = len(mats) // 2
    n_relu = n_layers - 1             # ReLU after every layer except the last

    x_flat = x_nchw.astype(jnp.float32).reshape(B, -1)      # NCHW -> (c,h,w) flatten
    x_flat = jnp.pad(x_flat, ((0, 0), (0, k_pad - x_flat.shape[1])))

    tm = TM if (B % TM == 0) else B
    grid = (B // tm,)

    def kernel(*refs):
        out_ref = refs[-1]
        h = refs[0][...]
        idx = 1
        for layer in range(n_layers):
            w = refs[idx][...]
            b = refs[idx + 1][...]
            idx += 2
            h = jnp.dot(h, w, preferred_element_type=jnp.float32) + b
            if layer < n_relu:
                h = jnp.maximum(h, 0.0)
        # Flatten is a no-op on the (c,h,w)-flattened activations.
        # TODO(synk): nn.Dropout is identity in eval mode; no stochastic mask here.
        out_ref[...] = h

    in_specs = [pl.BlockSpec((tm, k_pad), lambda i: (i, 0))]
    for m in mats:                                         # weights/biases: whole array
        in_specs.append(pl.BlockSpec(m.shape, lambda i: (0, 0)))
    out_spec = pl.BlockSpec((tm, n_pad), lambda i: (i, 0))

    flops = 2 * B * sum(int(mats[2 * j].shape[0]) * int(mats[2 * j].shape[1])
                        for j in range(n_layers))
    bytes_accessed = 4 * (int(x_flat.size)
                          + sum(int(np.prod(m.shape)) for m in mats)
                          + B * n_pad)

    out = pl.pallas_call(
        kernel,
        out_shape=jax.ShapeDtypeStruct((B, n_pad), jnp.float32),
        grid=grid,
        in_specs=in_specs,
        out_specs=out_spec,
        compiler_params=pltpu.CompilerParams(dimension_semantics=("parallel",)),
        cost_estimate=pl.CostEstimate(flops=flops, transcendentals=0,
                                      bytes_accessed=bytes_accessed),
    )(x_flat, *mats)
    return out[:, :out_neurons]        # drop the zero padding lanes


# ---------------- pure-JAX reference (verification only) ----------------
def _conv_same(x, w, b):
    k = w.shape[-1]
    pad = ((k - 1) // 2, k // 2)       # PyTorch 'same': asymmetric for even k
    y = jax.lax.conv_general_dilated(
        x, jnp.asarray(w), window_strides=(1, 1), padding=(pad, pad),
        dimension_numbers=("NCHW", "OIHW", "NCHW"))
    return y + jnp.asarray(b)[None, :, None, None]


def dqcnn_forward_ref(x, params):
    h = jnp.asarray(x, jnp.float32)
    for (w, b, g, bt, mu, vr) in params["convs"]:
        h = _conv_same(h, w, b)
        h = (h - mu[None, :, None, None]) / jnp.sqrt(vr[None, :, None, None] + BN_EPS) \
            * g[None, :, None, None] + bt[None, :, None, None]
        h = jnp.maximum(h, 0.0)
    h = h.reshape(h.shape[0], -1)
    w1, b1 = params["fc1"]
    g, bt, mu, vr = params["bn1d"]
    h = h @ jnp.asarray(w1) + jnp.asarray(b1)
    h = (h - mu) / jnp.sqrt(vr + BN_EPS) * g + bt
    h = jnp.maximum(h, 0.0)            # Dropout == identity (eval)
    w2, b2 = params["fc2"]
    return h @ jnp.asarray(w2) + jnp.asarray(b2)


if __name__ == "__main__":
    root = jax.random.PRNGKey(0)
    key_x, key_p = jax.random.split(root)

    x = jax.random.normal(
        key_x, (BATCH, INPUT_NEURONS, STATE_SIZE, STATE_SIZE), jnp.float32)

    params = init_params(key_p, INPUT_NEURONS, HIDDEN_NEURONS,
                         OUTPUT_NEURONS, STATE_SIZE)

    # Host-side lowering happens exactly once; the jitted forward only sees
    # ready device arrays (no per-call numpy work or weight re-upload).
    mats = prepare_mats(params, STATE_SIZE)
    forward = jax.jit(functools.partial(dqcnn_forward_pallas,
                                        out_neurons=OUTPUT_NEURONS))

    out = jax.block_until_ready(forward(x, mats))

    ref = jax.block_until_ready(dqcnn_forward_ref(x, params))
    np.testing.assert_allclose(np.asarray(out), np.asarray(ref),
                               rtol=1e-3, atol=1e-3)

    print("KERNEL_OK")
</pallas_src>

<mosaic_0001>
module attributes {stable_mosaic.version = 11 : i64} {
  func.func @kernel(%arg0: i32, %arg1: memref<128x128xf32, #tpu.memory_space<vmem>>, %arg2: memref<128x256xf32, #tpu.memory_space<vmem>>, %arg3: memref<1x256xf32, #tpu.memory_space<vmem>>, %arg4: memref<256x256xf32, #tpu.memory_space<vmem>>, %arg5: memref<1x256xf32, #tpu.memory_space<vmem>>, %arg6: memref<256x128xf32, #tpu.memory_space<vmem>>, %arg7: memref<1x128xf32, #tpu.memory_space<vmem>>, %arg8: memref<128x128xf32, #tpu.memory_space<vmem>>, %arg9: memref<1x128xf32, #tpu.memory_space<vmem>>, %arg10: memref<128x128xf32, #tpu.memory_space<vmem>>) attributes {dimension_semantics = [#tpu.dimension_semantics<parallel>], iteration_bounds = array<i64: 2>, scalar_prefetch = 0 : i64, scratch_operands = 0 : i64, tpu.core_type = #tpu.core_type<tc>, window_params = [{transform_indices = @transform_0, window_bounds = array<i64: 128, 128>}, {pipeline_mode = #tpu.pipeline_mode<synchronous>, transform_indices = @transform_1, window_bounds = array<i64: 128, 256>}, {pipeline_mode = #tpu.pipeline_mode<synchronous>, transform_indices = @transform_2, window_bounds = array<i64: 1, 256>}, {pipeline_mode = #tpu.pipeline_mode<synchronous>, transform_indices = @transform_3, window_bounds = array<i64: 256, 256>}, {pipeline_mode = #tpu.pipeline_mode<synchronous>, transform_indices = @transform_4, window_bounds = array<i64: 1, 256>}, {pipeline_mode = #tpu.pipeline_mode<synchronous>, transform_indices = @transform_5, window_bounds = array<i64: 256, 128>}, {pipeline_mode = #tpu.pipeline_mode<synchronous>, transform_indices = @transform_6, window_bounds = array<i64: 1, 128>}, {pipeline_mode = #tpu.pipeline_mode<synchronous>, transform_indices = @transform_7, window_bounds = array<i64: 128, 128>}, {pipeline_mode = #tpu.pipeline_mode<synchronous>, transform_indices = @transform_8, window_bounds = array<i64: 1, 128>}, {transform_indices = @transform_9, window_bounds = array<i64: 128, 128>}]} {
    %c0 = arith.constant 0 : index
    %c0_0 = arith.constant 0 : index
    %0 = vector.load %arg1[%c0, %c0_0] : memref<128x128xf32, #tpu.memory_space<vmem>>, vector<128x128xf32>
    %c0_1 = arith.constant 0 : index
    %c0_2 = arith.constant 0 : index
    %1 = vector.load %arg2[%c0_1, %c0_2] : memref<128x256xf32, #tpu.memory_space<vmem>>, vector<128x256xf32>
    %c0_3 = arith.constant 0 : index
    %c0_4 = arith.constant 0 : index
    %2 = vector.load %arg3[%c0_3, %c0_4] : memref<1x256xf32, #tpu.memory_space<vmem>>, vector<1x256xf32>
    %cst = arith.constant dense<0.000000e+00> : vector<128x256xf32>
    %3 = tpu.matmul %0, %1, %cst {dimension_numbers = #tpu.dot_dimension_numbers<[1], [0], [0], [1], [0, 0, 1, 1], [], []>} : vector<128x128xf32>, vector<128x256xf32>, vector<128x256xf32> -> vector<128x256xf32>
    %4 = vector.broadcast %2 : vector<1x256xf32> to vector<128x256xf32>
    %5 = arith.addf %3, %4 : vector<128x256xf32>
    %cst_5 = arith.constant 0.000000e+00 : f32
    %6 = vector.broadcast %cst_5 : f32 to vector<128x256xf32>
    %7 = arith.maximumf %5, %6 : vector<128x256xf32>
    %c0_6 = arith.constant 0 : index
    %c0_7 = arith.constant 0 : index
    %8 = vector.load %arg4[%c0_6, %c0_7] : memref<256x256xf32, #tpu.memory_space<vmem>>, vector<256x256xf32>
    %c0_8 = arith.constant 0 : index
    %c0_9 = arith.constant 0 : index
    %9 = vector.load %arg5[%c0_8, %c0_9] : memref<1x256xf32, #tpu.memory_space<vmem>>, vector<1x256xf32>
    %cst_10 = arith.constant dense<0.000000e+00> : vector<128x256xf32>
    %10 = tpu.matmul %7, %8, %cst_10 {dimension_numbers = #tpu.dot_dimension_numbers<[1], [0], [0], [1], [0, 0, 1, 1], [], []>} : vector<128x256xf32>, vector<256x256xf32>, vector<128x256xf32> -> vector<128x256xf32>
    %11 = vector.broadcast %9 : vector<1x256xf32> to vector<128x256xf32>
    %12 = arith.addf %10, %11 : vector<128x256xf32>
    %cst_11 = arith.constant 0.000000e+00 : f32
    %13 = vector.broadcast %cst_11 : f32 to vector<128x256xf32>
    %14 = arith.maximumf %12, %13 : vector<128x256xf32>
    %c0_12 = arith.constant 0 : index
    %c0_13 = arith.constant 0 : index
    %15 = vector.load %arg6[%c0_12, %c0_13] : memref<256x128xf32, #tpu.memory_space<vmem>>, vector<256x128xf32>
    %c0_14 = arith.constant 0 : index
    %c0_15 = arith.constant 0 : index
    %16 = vector.load %arg7[%c0_14, %c0_15] : memref<1x128xf32, #tpu.memory_space<vmem>>, vector<1x128xf32>
    %cst_16 = arith.constant dense<0.000000e+00> : vector<128x128xf32>
    %17 = tpu.matmul %14, %15, %cst_16 {dimension_numbers = #tpu.dot_dimension_numbers<[1], [0], [0], [1], [0, 0, 1, 1], [], []>} : vector<128x256xf32>, vector<256x128xf32>, vector<128x128xf32> -> vector<128x128xf32>
    %18 = vector.broadcast %16 : vector<1x128xf32> to vector<128x128xf32>
    %19 = arith.addf %17, %18 : vector<128x128xf32>
    %cst_17 = arith.constant 0.000000e+00 : f32
    %20 = vector.broadcast %cst_17 : f32 to vector<128x128xf32>
    %21 = arith.maximumf %19, %20 : vector<128x128xf32>
    %c0_18 = arith.constant 0 : index
    %c0_19 = arith.constant 0 : index
    %22 = vector.load %arg8[%c0_18, %c0_19] : memref<128x128xf32, #tpu.memory_space<vmem>>, vector<128x128xf32>
    %c0_20 = arith.constant 0 : index
    %c0_21 = arith.constant 0 : index
    %23 = vector.load %arg9[%c0_20, %c0_21] : memref<1x128xf32, #tpu.memory_space<vmem>>, vector<1x128xf32>
    %cst_22 = arith.constant dense<0.000000e+00> : vector<128x128xf32>
    %24 = tpu.matmul %21, %22, %cst_22 {dimension_numbers = #tpu.dot_dimension_numbers<[1], [0], [0], [1], [0, 0, 1, 1], [], []>} : vector<128x128xf32>, vector<128x128xf32>, vector<128x128xf32> -> vector<128x128xf32>
    %25 = vector.broadcast %23 : vector<1x128xf32> to vector<128x128xf32>
    %26 = arith.addf %24, %25 : vector<128x128xf32>
    %c0_23 = arith.constant 0 : index
    %c0_24 = arith.constant 0 : index
    %27 = vector.load %arg10[%c0_23, %c0_24] : memref<128x128xf32, #tpu.memory_space<vmem>>, vector<128x128xf32>
    tpu.vector_store %arg10[%c0_23, %c0_24], %26 {strides = array<i32>} : memref<128x128xf32, #tpu.memory_space<vmem>>, vector<128x128xf32>,
    return
  }
  func.func @transform_0(%arg0: i32) -> (i32, i32) {
    %c0_i32 = arith.constant 0 : i32
    %c0_i32_0 = arith.constant 0 : i32
    return %arg0, %c0_i32 : i32, i32
  }
  func.func @transform_1(%arg0: i32) -> (i32, i32) {
    %c0_i32 = arith.constant 0 : i32
    %c0_i32_0 = arith.constant 0 : i32
    %c0_i32_1 = arith.constant 0 : i32
    return %c0_i32, %c0_i32_0 : i32, i32
  }
  func.func @transform_2(%arg0: i32) -> (i32, i32) {
    %c0_i32 = arith.constant 0 : i32
    %c0_i32_0 = arith.constant 0 : i32
    %c0_i32_1 = arith.constant 0 : i32
    return %c0_i32, %c0_i32_0 : i32, i32
  }
  func.func @transform_3(%arg0: i32) -> (i32, i32) {
    %c0_i32 = arith.constant 0 : i32
    %c0_i32_0 = arith.constant 0 : i32
    %c0_i32_1 = arith.constant 0 : i32
    return %c0_i32, %c0_i32_0 : i32, i32
  }
  func.func @transform_4(%arg0: i32) -> (i32, i32) {
    %c0_i32 = arith.constant 0 : i32
    %c0_i32_0 = arith.constant 0 : i32
    %c0_i32_1 = arith.constant 0 : i32
    return %c0_i32, %c0_i32_0 : i32, i32
  }
  func.func @transform_5(%arg0: i32) -> (i32, i32) {
    %c0_i32 = arith.constant 0 : i32
    %c0_i32_0 = arith.constant 0 : i32
    %c0_i32_1 = arith.constant 0 : i32
    return %c0_i32, %c0_i32_0 : i32, i32
  }
  func.func @transform_6(%arg0: i32) -> (i32, i32) {
    %c0_i32 = arith.constant 0 : i32
    %c0_i32_0 = arith.constant 0 : i32
    %c0_i32_1 = arith.constant 0 : i32
    return %c0_i32, %c0_i32_0 : i32, i32
  }
  func.func @transform_7(%arg0: i32) -> (i32, i32) {
    %c0_i32 = arith.constant 0 : i32
    %c0_i32_0 = arith.constant 0 : i32
    %c0_i32_1 = arith.constant 0 : i32
    return %c0_i32, %c0_i32_0 : i32, i32
  }
  func.func @transform_8(%arg0: i32) -> (i32, i32) {
    %c0_i32 = arith.constant 0 : i32
    %c0_i32_0 = arith.constant 0 : i32
    %c0_i32_1 = arith.constant 0 : i32
    return %c0_i32, %c0_i32_0 : i32, i32
  }
  func.func @transform_9(%arg0: i32) -> (i32, i32) {
    %c0_i32 = arith.constant 0 : i32
    %c0_i32_0 = arith.constant 0 : i32
    return %arg0, %c0_i32 : i32, i32
  }
}

</mosaic_0001>

<llo_original>
// kernel: dqcnn_forward_pallas.1
$region0: #{dqcnn_forward_pallas.1}
  #allocation0 [shape = 'u32[]', space=smem, size = 0x4, offset = 0x4, fixed_abs, tag = 'smem constant byte address 0x4 - core index']
  #allocation1 [shape = 'u32[144,128]{1,0:T(1,128)}', space=vmem, size = 0x12000, scoped, tag = 'internal scratch']
  %s0 = inlined_call_operand.vmem [shape: f32[256,128], index: 0, kind: input, shape index: {}]
  %s1 = inlined_call_operand.vmem [shape: f32[128,256], index: 1, kind: input, shape index: {}]
  %s2 = inlined_call_operand.hbm [shape: f32[1,256], index: 2, kind: input, shape index: {}]
  %s3 = inlined_call_operand.vmem [shape: f32[256,256], index: 3, kind: input, shape index: {}]
  %s4 = inlined_call_operand.vmem [shape: f32[1,256], index: 4, kind: input, shape index: {}]
  %s5 = inlined_call_operand.vmem [shape: f32[256,128], index: 5, kind: input, shape index: {}]
  %s6 = inlined_call_operand.vmem [shape: f32[1,128], index: 6, kind: input, shape index: {}]
  %s7 = inlined_call_operand.vmem [shape: f32[128,128], index: 7, kind: input, shape index: {}]
  %s8 = inlined_call_operand.vmem [shape: f32[1,128], index: 8, kind: input, shape index: {}]
  %s9 = inlined_call_operand.vmem [shape: f32[256,128], index: 9, kind: output, shape index: {}]
  %s10 = sld [smem:[#allocation0]]
  $region73: #{dqcnn_forward_pallas.1} parent=0
    _
  %s12 = ssub.s32 1, %s10
  %s13 = scalar_select 0, %s12, %s10
  $region1: #{dqcnn_forward_pallas.1} parent=0
    #allocation2 [shape = 'u8[1024]{0}', space=vmem, size = 0x400, scoped, tag = 'input window, operand 2, single buffered']
    #allocation3 [shape = 's32[2]{0}', space=sflag, size = 0x8, scoped, tag = 'scoped memory for dqcnn_forward_pallas.1']
    %14 = vsyncpa [#allocation3], 0
    loop: start=0, step=1, limit=4
    $region2: #{dqcnn_forward_pallas.1} parent=1 // loop_pre_header
      _
    $region3: #{dqcnn_forward_pallas.1} parent=1 // loop_header
      %s16 = sphi 0, %s20
      %p17 = scmp.ge.s32.totalorder %s16, 4
      %s26 = sphi 0, %s28
      %s29 = sphi 0, %s26
      %s30 = sphi 0, %s29
      %s46 = sphi 0, %s30
      %s50 = sphi 0, %s50
      %s52 = sphi 0, %s50
      %s53 = sphi 0, %s52
      %s67 = sphi 0, %s53
      %s71 = sphi 0, %s71
      %s73 = sphi 0, %s71
      %s74 = sphi 0, %s73
      %s88 = sphi 0, %s74
      %s92 = sphi 0, %s92
      %s94 = sphi 0, %s92
      %s95 = sphi 0, %s94
      %s109 = sphi 0, %s95
      %s113 = sphi 0, %s113
      %s115 = sphi 0, %s113
      %s116 = sphi 0, %s115
      %s130 = sphi 0, %s116
      %s134 = sphi 0, %s134
      %s136 = sphi 0, %s134
      %s137 = sphi 0, %s136
      %s151 = sphi 0, %s137
      %s155 = sphi 0, %s155
      %s157 = sphi 0, %s155
      %s158 = sphi 0, %s157
      %s172 = sphi 0, %s158
      %s176 = sphi 0, %s176
      %s178 = sphi 0, %s176
      %s179 = sphi 0, %s178
      %s193 = sphi 0, %s179
      %s197 = sphi 0, %s197
      %s199 = sphi 0, %s197
      %s200 = sphi 0, %s199
      %s214 = sphi 0, %s200
      %s220 = sphi 0, %s222
      %s223 = sphi 0, %s220
      %s224 = sphi 0, %s223
      %s240 = sphi 0, %s224
    $region4: #{dqcnn_forward_pallas.1} parent=1 // loop_header_branch
      %19 = sbr.rel (%p17) target = $region8
    $region5: #{dqcnn_forward_pallas.1} parent=1 // loop_body
      %s21 = ssub.s32 %s16, 1
      %s22 = ssub.s32 %s16, 2
      %s23 = sadd.s32 %s16, 1
      %s24 = ssub.s32 %s16, %s23
      %p25 = scmp.eq.s32.totalorder %s24, 0
      %s27 = sadd.s32 %s26, 1
      %s28 = scalar_select %p25, %s26, %s27
      %p31 = pneg %p25
      %p32 = scmp.eq.s32.totalorder %s16, 1
      %p33 = por %p31, %p32
      %p34 = scmp.ne.s32.totalorder %s26, %s29
      %p35 = scmp.eq.s32.totalorder %s16, 0
      %p36 = por %p34, %p35
      %p37 = scmp.ne.s32.totalorder %s26, %s29
      %p38 = scmp.eq.s32.totalorder %s21, 1
      %p39 = por %p37, %p38
      %p40 = scmp.ne.s32.totalorder %s29, %s30
      %p41 = scmp.eq.s32.totalorder %s21, 0
      %p42 = por %p40, %p41
      %p43 = scmp.ne.s32.totalorder %s29, %s30
      %p44 = scmp.eq.s32.totalorder %s22, 1
      %p45 = por %p43, %p44
      %p47 = scmp.ne.s32.totalorder %s30, %s46
      %p48 = scmp.eq.s32.totalorder %s22, 0
      %p49 = por %p47, %p48
      %s51 = sadd.s32 %s50, 1
      %p54 = scmp.eq.s32.totalorder %s16, 1
      %p55 = scmp.ne.s32.totalorder %s50, %s52
      %p56 = scmp.eq.s32.totalorder %s16, 0
      %p57 = por %p55, %p56
      %p58 = scmp.ne.s32.totalorder %s50, %s52
      %p59 = scmp.eq.s32.totalorder %s21, 1
      %p60 = por %p58, %p59
      %p61 = scmp.ne.s32.totalorder %s52, %s53
      %p62 = scmp.eq.s32.totalorder %s21, 0
      %p63 = por %p61, %p62
      %p64 = scmp.ne.s32.totalorder %s52, %s53
      %p65 = scmp.eq.s32.totalorder %s22, 1
      %p66 = por %p64, %p65
      %p68 = scmp.ne.s32.totalorder %s53, %s67
      %p69 = scmp.eq.s32.totalorder %s22, 0
      %p70 = por %p68, %p69
      %s72 = sadd.s32 %s71, 1
      %p75 = scmp.eq.s32.totalorder %s16, 1
      %p76 = scmp.ne.s32.totalorder %s71, %s73
      %p77 = scmp.eq.s32.totalorder %s16, 0
      %p78 = por %p76, %p77
      %p79 = scmp.ne.s32.totalorder %s71, %s73
      %p80 = scmp.eq.s32.totalorder %s21, 1
      %p81 = por %p79, %p80
      %p82 = scmp.ne.s32.totalorder %s73, %s74
      %p83 = scmp.eq.s32.totalorder %s21, 0
      %p84 = por %p82, %p83
      %p85 = scmp.ne.s32.totalorder %s73, %s74
      %p86 = scmp.eq.s32.totalorder %s22, 1
      %p87 = por %p85, %p86
      %p89 = scmp.ne.s32.totalorder %s74, %s88
      %p90 = scmp.eq.s32.totalorder %s22, 0
      %p91 = por %p89, %p90
      %s93 = sadd.s32 %s92, 1
      %p96 = scmp.eq.s32.totalorder %s16, 1
      %p97 = scmp.ne.s32.totalorder %s92, %s94
      %p98 = scmp.eq.s32.totalorder %s16, 0
      %p99 = por %p97, %p98
      %p100 = scmp.ne.s32.totalorder %s92, %s94
      %p101 = scmp.eq.s32.totalorder %s21, 1
      %p102 = por %p100, %p101
      %p103 = scmp.ne.s32.totalorder %s94, %s95
      %p104 = scmp.eq.s32.totalorder %s21, 0
      %p105 = por %p103, %p104
      %p106 = scmp.ne.s32.totalorder %s94, %s95
      %p107 = scmp.eq.s32.totalorder %s22, 1
      %p108 = por %p106, %p107
      %p110 = scmp.ne.s32.totalorder %s95, %s109
      %p111 = scmp.eq.s32.totalorder %s22, 0
      %p112 = por %p110, %p111
      %s114 = sadd.s32 %s113, 1
      %p117 = scmp.eq.s32.totalorder %s16, 1
      %p118 = scmp.ne.s32.totalorder %s113, %s115
      %p119 = scmp.eq.s32.totalorder %s16, 0
      %p120 = por %p118, %p119
      %p121 = scmp.ne.s32.totalorder %s113, %s115
      %p122 = scmp.eq.s32.totalorder %s21, 1
      %p123 = por %p121, %p122
      %p124 = scmp.ne.s32.totalorder %s115, %s116
      %p125 = scmp.eq.s32.totalorder %s21, 0
      %p126 = por %p124, %p125
      %p127 = scmp.ne.s32.totalorder %s115, %s116
      %p128 = scmp.eq.s32.totalorder %s22, 1
      %p129 = por %p127, %p128
      %p131 = scmp.ne.s32.totalorder %s116, %s130
      %p132 = scmp.eq.s32.totalorder %s22, 0
      %p133 = por %p131, %p132
      %s135 = sadd.s32 %s134, 1
      %p138 = scmp.eq.s32.totalorder %s16, 1
      %p139 = scmp.ne.s32.totalorder %s134, %s136
      %p140 = scmp.eq.s32.totalorder %s16, 0
      %p141 = por %p139, %p140
      %p142 = scmp.ne.s32.totalorder %s134, %s136
      %p143 = scmp.eq.s32.totalorder %s21, 1
      %p144 = por %p142, %p143
      %p145 = scmp.ne.s32.totalorder %s136, %s137
      %p146 = scmp.eq.s32.totalorder %s21, 0
      %p147 = por %p145, %p146
      %p148 = scmp.ne.s32.totalorder %s136, %s137
      %p149 = scmp.eq.s32.totalorder %s22, 1
      %p150 = por %p148, %p149
      %p152 = scmp.ne.s32.totalorder %s137, %s151
      %p153 = scmp.eq.s32.totalorder %s22, 0
      %p154 = por %p152, %p153
      %s156 = sadd.s32 %s155, 1
      %p159 = scmp.eq.s32.totalorder %s16, 1
      %p160 = scmp.ne.s32.totalorder %s155, %s157
      %p161 = scmp.eq.s32.totalorder %s16, 0
      %p162 = por %p160, %p161
      %p163 = scmp.ne.s32.totalorder %s155, %s157
      %p164 = scmp.eq.s32.totalorder %s21, 1
      %p165 = por %p163, %p164
      %p166 = scmp.ne.s32.totalorder %s157, %s158
      %p167 = scmp.eq.s32.totalorder %s21, 0
      %p168 = por %p166, %p167
      %p169 = scmp.ne.s32.totalorder %s157, %s158
      %p170 = scmp.eq.s32.totalorder %s22, 1
      %p171 = por %p169, %p170
      %p173 = scmp.ne.s32.totalorder %s158, %s172
      %p174 = scmp.eq.s32.totalorder %s22, 0
      %p175 = por %p173, %p174
      %s177 = sadd.s32 %s176, 1
      %p180 = scmp.eq.s32.totalorder %s16, 1
      %p181 = scmp.ne.s32.totalorder %s176, %s178
      %p182 = scmp.eq.s32.totalorder %s16, 0
      %p183 = por %p181, %p182
      %p184 = scmp.ne.s32.totalorder %s176, %s178
      %p185 = scmp.eq.s32.totalorder %s21, 1
      %p186 = por %p184, %p185
      %p187 = scmp.ne.s32.totalorder %s178, %s179
      %p188 = scmp.eq.s32.totalorder %s21, 0
      %p189 = por %p187, %p188
      %p190 = scmp.ne.s32.totalorder %s178, %s179
      %p191 = scmp.eq.s32.totalorder %s22, 1
      %p192 = por %p190, %p191
      %p194 = scmp.ne.s32.totalorder %s179, %s193
      %p195 = scmp.eq.s32.totalorder %s22, 0
      %p196 = por %p194, %p195
      %s198 = sadd.s32 %s197, 1
      %p201 = scmp.eq.s32.totalorder %s16, 1
      %p202 = scmp.ne.s32.totalorder %s197, %s199
      %p203 = scmp.eq.s32.totalorder %s16, 0
      %p204 = por %p202, %p203
      %p205 = scmp.ne.s32.totalorder %s197, %s199
      %p206 = scmp.eq.s32.totalorder %s21, 1
      %p207 = por %p205, %p206
      %p208 = scmp.ne.s32.totalorder %s199, %s200
      %p209 = scmp.eq.s32.totalorder %s21, 0
      %p210 = por %p208, %p209
      %p211 = scmp.ne.s32.totalorder %s199, %s200
      %p212 = scmp.eq.s32.totalorder %s22, 1
      %p213 = por %p211, %p212
      %p215 = scmp.ne.s32.totalorder %s200, %s214
      %p216 = scmp.eq.s32.totalorder %s22, 0
      %p217 = por %p215, %p216
      %s218 = ssub.s32 %s16, %s23
      %p219 = scmp.eq.s32.totalorder %s218, 0
      %s221 = sadd.s32 %s220, 1
      %s222 = scalar_select %p219, %s220, %s221
      %p225 = pneg %p219
      %p226 = scmp.eq.s32.totalorder %s16, 1
      %p227 = por %p225, %p226
      %p228 = scmp.ne.s32.totalorder %s220, %s223
      %p229 = scmp.eq.s32.totalorder %s16, 0
      %p230 = por %p228, %p229
      %p231 = scmp.ne.s32.totalorder %s220, %s223
      %p232 = scmp.eq.s32.totalorder %s21, 1
      %p233 = por %p231, %p232
      %p234 = scmp.ne.s32.totalorder %s223, %s224
      %p235 = scmp.eq.s32.totalorder %s21, 0
      %p236 = por %p234, %p235
      %p237 = scmp.ne.s32.totalorder %s223, %s224
      %p238 = scmp.eq.s32.totalorder %s22, 1
      %p239 = por %p237, %p238
      %p241 = scmp.ne.s32.totalorder %s224, %s240
      %p242 = scmp.eq.s32.totalorder %s22, 0
      %p243 = por %p241, %p242
      %p244 = scmp.le.s32.totalorder 1, %s16
      %p245 = scmp.lt.s32.totalorder %s16, 3
      %p246 = pnand %p244, %p245
      %p247 = pneg %p246
      // Predicated region
      $region9: #{dqcnn_forward_pallas.1} parent=5 // pred_check
        _
      $region10: #{dqcnn_forward_pallas.1} parent=5 // pred_check_branch
        %249 = sbr.rel (%p246) target = $region12
      $region11: #{dqcnn_forward_pallas.1} parent=5 // pred_region
        %s250 = ssub.s32 %s16, 1
        // Predicated region
        $region13: #{dqcnn_forward_pallas.1} parent=11 // pred_check
          %p251 = pneg %p63
        $region14: #{dqcnn_forward_pallas.1} parent=11 // pred_check_branch
          %253 = sbr.rel (%p251) target = $region16
        $region15: #{dqcnn_forward_pallas.1} parent=11 // pred_region
          _
        $region16: #{dqcnn_forward_pallas.1} parent=11 // pred_fallthru
          _
        // Predicated region
        $region17: #{dqcnn_forward_pallas.1} parent=11 // pred_check
          %p254 = pneg %p84
        $region18: #{dqcnn_forward_pallas.1} parent=11 // pred_check_branch
          %256 = sbr.rel (%p254) target = $region20
        $region19: #{dqcnn_forward_pallas.1} parent=11 // pred_region
          %s258 = ssub.s32 32, 32
          %259 = vsyncadd [#allocation3], %s258
          %s261 = sshll.u32 [#allocation2], 4
          %s262 = int_to_ptr.vmem [resolvable:$true] %s261
          %264 = dma.hbm_to_vmem [thread:$0]  %s2, 32, %s262, [#allocation3]
        $region20: #{dqcnn_forward_pallas.1} parent=11 // pred_fallthru
          _
        // Predicated region
        $region21: #{dqcnn_forward_pallas.1} parent=11 // pred_check
          %p265 = pneg %p105
        $region22: #{dqcnn_forward_pallas.1} parent=11 // pred_check_branch
          %267 = sbr.rel (%p265) target = $region24
        $region23: #{dqcnn_forward_pallas.1} parent=11 // pred_region
          _
        $region24: #{dqcnn_forward_pallas.1} parent=11 // pred_fallthru
          _
        // Predicated region
        $region25: #{dqcnn_forward_pallas.1} parent=11 // pred_check
          %p268 = pneg %p126
        $region26: #{dqcnn_forward_pallas.1} parent=11 // pred_check_branch
          %270 = sbr.rel (%p268) target = $region28
        $region27: #{dqcnn_forward_pallas.1} parent=11 // pred_region
          _
        $region28: #{dqcnn_forward_pallas.1} parent=11 // pred_fallthru
          _
        // Predicated region
        $region29: #{dqcnn_forward_pallas.1} parent=11 // pred_check
          %p271 = pneg %p147
        $region30: #{dqcnn_forward_pallas.1} parent=11 // pred_check_branch
          %273 = sbr.rel (%p271) target = $region32
        $region31: #{dqcnn_forward_pallas.1} parent=11 // pred_region
          _
        $region32: #{dqcnn_forward_pallas.1} parent=11 // pred_fallthru
          _
        // Predicated region
        $region33: #{dqcnn_forward_pallas.1} parent=11 // pred_check
          %p274 = pneg %p168
        $region34: #{dqcnn_forward_pallas.1} parent=11 // pred_check_branch
          %276 = sbr.rel (%p274) target = $region36
        $region35: #{dqcnn_forward_pallas.1} parent=11 // pred_region
          _
        $region36: #{dqcnn_forward_pallas.1} parent=11 // pred_fallthru
          _
        // Predicated region
        $region37: #{dqcnn_forward_pallas.1} parent=11 // pred_check
          %p277 = pneg %p189
        $region38: #{dqcnn_forward_pallas.1} parent=11 // pred_check_branch
          %279 = sbr.rel (%p277) target = $region40
        $region39: #{dqcnn_forward_pallas.1} parent=11 // pred_region
          _
        $region40: #{dqcnn_forward_pallas.1} parent=11 // pred_fallthru
          _
        // Predicated region
        $region41: #{dqcnn_forward_pallas.1} parent=11 // pred_check
          %p280 = pneg %p210
        $region42: #{dqcnn_forward_pallas.1} parent=11 // pred_check_branch
          %282 = sbr.rel (%p280) target = $region44
        $region43: #{dqcnn_forward_pallas.1} parent=11 // pred_region
          _
        $region44: #{dqcnn_forward_pallas.1} parent=11 // pred_fallthru
          _
      $region12: #{dqcnn_forward_pallas.1} parent=5 // pred_fallthru
        _
      %p283 = scmp.lt.s32.totalorder %s16, 2
      // Predicated region
      $region45: #{dqcnn_forward_pallas.1} parent=5 // pred_check
        %p284 = pneg %p283
      $region46: #{dqcnn_forward_pallas.1} parent=5 // pred_check_branch
        %286 = sbr.rel (%p284) target = $region48
      $region47: #{dqcnn_forward_pallas.1} parent=5 // pred_region
        // Predicated region
        $region49: #{dqcnn_forward_pallas.1} parent=47 // pred_check
          %p287 = pneg %p36
        $region50: #{dqcnn_forward_pallas.1} parent=47 // pred_check_branch
          %289 = sbr.rel (%p287) target = $region52
        $region51: #{dqcnn_forward_pallas.1} parent=47 // pred_region
          %s290 = smul.u32 16, %s16
          %p291 = scmp.lt.s32.totalorder %s290, 31
          %s292 = scalar_select %p291, %s290, 31
          %s293 = smul.addr %s292, 8
          %s294 = scalar_lea.vmem %s0, %s293
          %s295 = smul.u32 16, %s16
        $region52: #{dqcnn_forward_pallas.1} parent=47 // pred_fallthru
          _
      $region48: #{dqcnn_forward_pallas.1} parent=5 // pred_fallthru
        _
      %p296 = scmp.le.s32.totalorder 1, %s16
      %p297 = scmp.lt.s32.totalorder %s16, 3
      %p298 = pnand %p296, %p297
      %p299 = pneg %p298
      // Predicated region
      $region53: #{dqcnn_forward_pallas.1} parent=5 // pred_check
        _
      $region54: #{dqcnn_forward_pallas.1} parent=5 // pred_check_branch
        %301 = sbr.rel (%p298) target = $region56
      $region55: #{dqcnn_forward_pallas.1} parent=5 // pred_region
        %s302 = ssub.s32 %s16, 1
        // Predicated region
        $region57: #{dqcnn_forward_pallas.1} parent=55 // pred_check
          %p303 = pneg %p84
        $region58: #{dqcnn_forward_pallas.1} parent=55 // pred_check_branch
          %305 = sbr.rel (%p303) target = $region60
        $region59: #{dqcnn_forward_pallas.1} parent=55 // pred_region
          %306 = dma.done [#allocation3], 32
        $region60: #{dqcnn_forward_pallas.1} parent=55 // pred_fallthru
          _
        %s307 = smul.u32 16, %s21
        %p308 = scmp.lt.s32.totalorder %s307, 31
        %s309 = scalar_select %p308, %s307, 31
        %s310 = smul.addr %s309, 8
        %s311 = scalar_lea.vmem %s0, %s310
        %p312 = pneg %p42
        %p313 = pneg %p39
        %p314 = pneg %p63
        %p315 = pneg %p60
        %p316 = pneg %p84
        %p317 = pneg %p81
        %p318 = pneg %p105
        %p319 = pneg %p102
        %p320 = pneg %p126
        %p321 = pneg %p123
        %p322 = pneg %p147
        %p323 = pneg %p144
        %p324 = pneg %p168
        %p325 = pneg %p165
        %p326 = pneg %p189
        %p327 = pneg %p186
        %p328 = pneg %p210
        %p329 = pneg %p207
        %p330 = pneg %p236
        %p331 = pneg %p233
        %s332 = smul.u32 16, %s21
        %p333 = scmp.lt.s32.totalorder %s332, 31
        %s334 = scalar_select %p333, %s332, 31
        %s335 = smul.addr %s334, 8
        %s336 = scalar_lea.vmem %s9, %s335
        %s337 = smul.u32 16, %s21
        %p338 = scmp.lt.s32.totalorder %s337, 31
        %s339 = scalar_select %p338, %s337, 31
        %s340 = smul.addr %s339, 8
        %s341 = scalar_lea.vmem %s0, %s340
        %s342 = smul.u32 16, %s21
        %s343 = smul.u32 16, %s21
        %p344 = scmp.lt.s32.totalorder %s343, 31
        %s345 = scalar_select %p344, %s343, 31
        %s346 = smul.addr %s345, 8
        %s347 = scalar_lea.vmem %s9, %s346
        %s348 = smul.u32 16, %s21
        %v349 = vld [vmem:[%s341] sm:$0xff]
        %v350 = vld [vmem:[%s341 + $0x8] sm:$0xff]
        %v351 = vld [vmem:[%s341 + $0x10] sm:$0xff]
        %v352 = vld [vmem:[%s341 + $0x18] sm:$0xff]
        %v353 = vld [vmem:[%s341 + $0x20] sm:$0xff]
        %v354 = vld [vmem:[%s341 + $0x28] sm:$0xff]
        %v355 = vld [vmem:[%s341 + $0x30] sm:$0xff]
        %v356 = vld [vmem:[%s341 + $0x38] sm:$0xff]
        %v357 = vld [vmem:[%s341 + $0x40] sm:$0xff]
        %v358 = vld [vmem:[%s341 + $0x48] sm:$0xff]
        %v359 = vld [vmem:[%s341 + $0x50] sm:$0xff]
        %v360 = vld [vmem:[%s341 + $0x58] sm:$0xff]
        %v361 = vld [vmem:[%s341 + $0x60] sm:$0xff]
        %v362 = vld [vmem:[%s341 + $0x68] sm:$0xff]
        %v363 = vld [vmem:[%s341 + $0x70] sm:$0xff]
        %v364 = vld [vmem:[%s341 + $0x78] sm:$0xff]
        %v365 = vld [vmem:[%s1] sm:$0xff]
        %v366 = vld [vmem:[%s1 + $0x8] sm:$0xff]
        %v367 = vld [vmem:[%s1 + $0x10] sm:$0xff]
        %v368 = vld [vmem:[%s1 + $0x18] sm:$0xff]
        %v369 = vld [vmem:[%s1 + $0x20] sm:$0xff]
        %v370 = vld [vmem:[%s1 + $0x28] sm:$0xff]
        %v371 = vld [vmem:[%s1 + $0x30] sm:$0xff]
        %v372 = vld [vmem:[%s1 + $0x38] sm:$0xff]
        %v373 = vld [vmem:[%s1 + $0x40] sm:$0xff]
        %v374 = vld [vmem:[%s1 + $0x48] sm:$0xff]
        %v375 = vld [vmem:[%s1 + $0x50] sm:$0xff]
        %v376 = vld [vmem:[%s1 + $0x58] sm:$0xff]
        %v377 = vld [vmem:[%s1 + $0x60] sm:$0xff]
        %v378 = vld [vmem:[%s1 + $0x68] sm:$0xff]
        %v379 = vld [vmem:[%s1 + $0x70] sm:$0xff]
        %v380 = vld [vmem:[%s1 + $0x78] sm:$0xff]
        %v381 = vld [vmem:[%s1 + $0x80] sm:$0xff]
        %v382 = vld [vmem:[%s1 + $0x88] sm:$0xff]
        %v383 = vld [vmem:[%s1 + $0x90] sm:$0xff]
        %v384 = vld [vmem:[%s1 + $0x98] sm:$0xff]
        %v385 = vld [vmem:[%s1 + $0xa0] sm:$0xff]
        %v386 = vld [vmem:[%s1 + $0xa8] sm:$0xff]
        %v387 = vld [vmem:[%s1 + $0xb0] sm:$0xff]
        %v388 = vld [vmem:[%s1 + $0xb8] sm:$0xff]
        %v389 = vld [vmem:[%s1 + $0xc0] sm:$0xff]
        %v390 = vld [vmem:[%s1 + $0xc8] sm:$0xff]
        %v391 = vld [vmem:[%s1 + $0xd0] sm:$0xff]
        %v392 = vld [vmem:[%s1 + $0xd8] sm:$0xff]
        %v393 = vld [vmem:[%s1 + $0xe0] sm:$0xff]
        %v394 = vld [vmem:[%s1 + $0xe8] sm:$0xff]
        %v395 = vld [vmem:[%s1 + $0xf0] sm:$0xff]
        %v396 = vld [vmem:[%s1 + $0xf8] sm:$0xff]
        %v397 = vld [vmem:[#allocation2] sm:$0x3]
        %v399 = vlaneseq
        %v400 = vshrl.u32 %v399, 7
        %v401 = vsub.s32 0, %v400
        %v402 = vrot.slane %v397, %v401
        %v403 = vlaneseq
        %v404 = vshrl.u32 %v403, 7
        %v405 = vsub.s32 1, %v404
        %v406 = vrot.slane %v397, %v405
        %409 = vmatprep.subr.mxu0 %v366
        %410 = vmatpush1.msra.mxu0 %v365
        %411 = vmatprep.subr.mxu0 %v368
        %412 = vmatpush1.msra.mxu0 %v367
        %413 = vmatprep.subr.mxu0 %v370
        %414 = vmatpush1.msra.mxu0 %v369
        %415 = vmatprep.subr.mxu0 %v372
        %416 = vmatpush1.msra.mxu0 %v371
        %417 = vmatprep.subr.mxu0 %v374
        %418 = vmatpush1.msra.mxu0 %v373
        %419 = vmatprep.subr.mxu0 %v376
        %420 = vmatpush1.msra.mxu0 %v375
        %421 = vmatprep.subr.mxu0 %v378
        %422 = vmatpush1.msra.mxu0 %v377
        %423 = vmatprep.subr.mxu0 %v380
        %424 = vmatpush1.msra.mxu0 %v379
        %425 = vmatprep.subr.mxu0 %v382
        %426 = vmatpush1.msra.mxu0 %v381
        %427 = vmatprep.subr.mxu0 %v384
        %428 = vmatpush1.msra.mxu0 %v383
        %429 = vmatprep.subr.mxu0 %v386
        %430 = vmatpush1.msra.mxu0 %v385
        %431 = vmatprep.subr.mxu0 %v388
        %432 = vmatpush1.msra.mxu0 %v387
        %433 = vmatprep.subr.mxu0 %v390
        %434 = vmatpush1.msra.mxu0 %v389
        %435 = vmatprep.subr.mxu0 %v392
        %436 = vmatpush1.msra.mxu0 %v391
        %437 = vmatprep.subr.mxu0 %v394
        %438 = vmatpush1.msra.mxu0 %v393
        %439 = vmatprep.subr.mxu0 %v396
        %440 = vmatpush1.msra.mxu0 %v395
        %441 = vmatprep.subr.mxu0 0.0
        %442 = vmatpush1.msra.mxu0 0.0
        %443 = vmatprep.subr.mxu0 0.0
        %444 = vmatpush1.msra.mxu0 0.0
        %445 = vmatprep.subr.mxu0 0.0
        %446 = vmatpush1.msra.mxu0 0.0
        %447 = vmatprep.subr.mxu0 0.0
        %448 = vmatpush1.msra.mxu0 0.0
        %449 = vmatprep.subr.mxu0 0.0
        %450 = vmatpush1.msra.mxu0 0.0
        %451 = vmatprep.subr.mxu0 0.0
        %452 = vmatpush1.msra.mxu0 0.0
        %453 = vmatprep.subr.mxu0 0.0
        %454 = vmatpush1.msra.mxu0 0.0
        %455 = vmatprep.subr.mxu0 0.0
        %456 = vmatpush1.msra.mxu0 0.0
        %457 = vmatprep.subr.mxu0 0.0
        %458 = vmatpush1.msra.mxu0 0.0
        %459 = vmatprep.subr.mxu0 0.0
        %460 = vmatpush1.msra.mxu0 0.0
        %461 = vmatprep.subr.mxu0 0.0
        %462 = vmatpush1.msra.mxu0 0.0
        %463 = vmatprep.subr.mxu0 0.0
        %464 = vmatpush1.msra.mxu0 0.0
        %465 = vmatprep.subr.mxu0 0.0
        %466 = vmatpush1.msra.mxu0 0.0
        %467 = vmatprep.subr.mxu0 0.0
        %468 = vmatpush1.msra.mxu0 0.0
        %469 = vmatprep.subr.mxu0 0.0
        %470 = vmatpush1.msra.mxu0 0.0
        %471 = vmatprep.subr.mxu0 0.0
        %472 = vmatpush1.msra.mxu0 0.0
        %473 = vmatprep.mubr.f32.mxu0 0.0
        %474 = vmatmul.mubr.f32.gmra.mrb[0].mxu0 %v349
        %v475 = vpop.f32.mrb[0].mxu0
        %v476 = vadd.f32 %v402, %v475
        %v477 = vpop.f32.mrb[0].mxu0
        %v478 = vadd.f32 %v406, %v477
        %479 = vmatprep.mubr.f32.mxu0 0.0
        %480 = vmatmul.mubr.f32.gmra.mrb[0].mxu0 %v350
        %v481 = vpop.f32.mrb[0].mxu0
        %v482 = vadd.f32 %v402, %v481
        %v483 = vpop.f32.mrb[0].mxu0
        %v484 = vadd.f32 %v406, %v483
        %485 = vmatprep.mubr.f32.mxu0 0.0
        %486 = vmatmul.mubr.f32.gmra.mrb[0].mxu0 %v351
        %v487 = vpop.f32.mrb[0].mxu0
        %v488 = vadd.f32 %v402, %v487
        %v489 = vpop.f32.mrb[0].mxu0
        %v490 = vadd.f32 %v406, %v489
        %491 = vmatprep.mubr.f32.mxu0 0.0
        %492 = vmatmul.mubr.f32.gmra.mrb[0].mxu0 %v352
        %v493 = vpop.f32.mrb[0].mxu0
        %v494 = vadd.f32 %v402, %v493
        %v495 = vpop.f32.mrb[0].mxu0
        %v496 = vadd.f32 %v406, %v495
        %497 = vmatprep.mubr.f32.mxu0 0.0
        %498 = vmatmul.mubr.f32.gmra.mrb[0].mxu0 %v353
        %v499 = vpop.f32.mrb[0].mxu0
        %v500 = vadd.f32 %v402, %v499
        %v501 = vpop.f32.mrb[0].mxu0
        %v502 = vadd.f32 %v406, %v501
        %503 = vmatprep.mubr.f32.mxu0 0.0
        %504 = vmatmul.mubr.f32.gmra.mrb[0].mxu0 %v354
        %v505 = vpop.f32.mrb[0].mxu0
        %v506 = vadd.f32 %v402, %v505
        %v507 = vpop.f32.mrb[0].mxu0
        %v508 = vadd.f32 %v406, %v507
        %509 = vmatprep.mubr.f32.mxu0 0.0
        %510 = vmatmul.mubr.f32.gmra.mrb[0].mxu0 %v355
        %v511 = vpop.f32.mrb[0].mxu0
        %v512 = vadd.f32 %v402, %v511
        %v513 = vpop.f32.mrb[0].mxu0
        %v514 = vadd.f32 %v406, %v513
        %515 = vmatprep.mubr.f32.mxu0 0.0
        %516 = vmatmul.mubr.f32.gmra.mrb[0].mxu0 %v356
        %v517 = vpop.f32.mrb[0].mxu0
        %v518 = vadd.f32 %v402, %v517
        %v519 = vpop.f32.mrb[0].mxu0
        %v520 = vadd.f32 %v406, %v519
        %521 = vmatprep.mubr.f32.mxu0 0.0
        %522 = vmatmul.mubr.f32.gmra.mrb[0].mxu0 %v357
        %v523 = vpop.f32.mrb[0].mxu0
        %v524 = vadd.f32 %v402, %v523
        %v525 = vpop.f32.mrb[0].mxu0
        %v526 = vadd.f32 %v406, %v525
        %527 = vmatprep.mubr.f32.mxu0 0.0
        %528 = vmatmul.mubr.f32.gmra.mrb[0].mxu0 %v358
        %v529 = vpop.f32.mrb[0].mxu0
        %v530 = vadd.f32 %v402, %v529
        %v531 = vpop.f32.mrb[0].mxu0
        %v532 = vadd.f32 %v406, %v531
        %533 = vmatprep.mubr.f32.mxu0 0.0
        %534 = vmatmul.mubr.f32.gmra.mrb[0].mxu0 %v359
        %v535 = vpop.f32.mrb[0].mxu0
        %v536 = vadd.f32 %v402, %v535
        %v537 = vpop.f32.mrb[0].mxu0
        %v538 = vadd.f32 %v406, %v537
        %539 = vmatprep.mubr.f32.mxu0 0.0
        %540 = vmatmul.mubr.f32.gmra.mrb[0].mxu0 %v360
        %v541 = vpop.f32.mrb[0].mxu0
        %v542 = vadd.f32 %v402, %v541
        %v543 = vpop.f32.mrb[0].mxu0
        %v544 = vadd.f32 %v406, %v543
        %545 = vmatprep.mubr.f32.mxu0 0.0
        %546 = vmatmul.mubr.f32.gmra.mrb[0].mxu0 %v361
        %v547 = vpop.f32.mrb[0].mxu0
        %v548 = vadd.f32 %v402, %v547
        %v549 = vpop.f32.mrb[0].mxu0
        %v550 = vadd.f32 %v406, %v549
        %551 = vmatprep.mubr.f32.mxu0 0.0
        %552 = vmatmul.mubr.f32.gmra.mrb[0].mxu0 %v362
        %v553 = vpop.f32.mrb[0].mxu0
        %v554 = vadd.f32 %v402, %v553
        %v555 = vpop.f32.mrb[0].mxu0
        %v556 = vadd.f32 %v406, %v555
        %557 = vmatprep.mubr.f32.mxu0 0.0
        %558 = vmatmul.mubr.f32.gmra.mrb[0].mxu0 %v363
        %v559 = vpop.f32.mrb[0].mxu0
        %v560 = vadd.f32 %v402, %v559
        %v561 = vpop.f32.mrb[0].mxu0
        %v562 = vadd.f32 %v406, %v561
        %563 = vmatprep.mubr.f32.mxu0 0.0
        %564 = vmatmul.mubr.f32.gmra.mrb[0].mxu0 %v364
        %v565 = vpop.f32.mrb[0].mxu0
        %v566 = vadd.f32 %v402, %v565
        %v567 = vpop.f32.mrb[0].mxu0
        %v568 = vadd.f32 %v406, %v567
        %569 = vdwg.mxu0
        %v570 = vmax.f32 %v476, 0.0
        %v571 = vmax.f32 %v478, 0.0
        %v572 = vmax.f32 %v482, 0.0
        %v573 = vmax.f32 %v484, 0.0
        %v574 = vmax.f32 %v488, 0.0
        %v575 = vmax.f32 %v490, 0.0
        %v576 = vmax.f32 %v494, 0.0
        %v577 = vmax.f32 %v496, 0.0
        %v578 = vmax.f32 %v500, 0.0
        %v579 = vmax.f32 %v502, 0.0
        %v580 = vmax.f32 %v506, 0.0
        %v581 = vmax.f32 %v508, 0.0
        %v582 = vmax.f32 %v512, 0.0
        %v583 = vmax.f32 %v514, 0.0
        %v584 = vmax.f32 %v518, 0.0
        %v585 = vmax.f32 %v520, 0.0
        %v586 = vmax.f32 %v524, 0.0
        %v587 = vmax.f32 %v526, 0.0
        %v588 = vmax.f32 %v530, 0.0
        %v589 = vmax.f32 %v532, 0.0
        %v590 = vmax.f32 %v536, 0.0
        %v591 = vmax.f32 %v538, 0.0
        %v592 = vmax.f32 %v542, 0.0
        %v593 = vmax.f32 %v544, 0.0
        %v594 = vmax.f32 %v548, 0.0
        %v595 = vmax.f32 %v550, 0.0
        %v596 = vmax.f32 %v554, 0.0
        %v597 = vmax.f32 %v556, 0.0
        %v598 = vmax.f32 %v560, 0.0
        %v599 = vmax.f32 %v562, 0.0
        %v600 = vmax.f32 %v566, 0.0
        %v601 = vmax.f32 %v568, 0.0
        %v602 = vld [vmem:[%s3] sm:$0xff]
        %v603 = vld [vmem:[%s3 + $0x8] sm:$0xff]
        %v604 = vld [vmem:[%s3 + $0x10] sm:$0xff]
        %v605 = vld [vmem:[%s3 + $0x18] sm:$0xff]
        %v606 = vld [vmem:[%s3 + $0x20] sm:$0xff]
        %v607 = vld [vmem:[%s3 + $0x28] sm:$0xff]
        %v608 = vld [vmem:[%s3 + $0x30] sm:$0xff]
        %v609 = vld [vmem:[%s3 + $0x38] sm:$0xff]
        %v610 = vld [vmem:[%s3 + $0x40] sm:$0xff]
        %v611 = vld [vmem:[%s3 + $0x48] sm:$0xff]
        %v612 = vld [vmem:[%s3 + $0x50] sm:$0xff]
        %v613 = vld [vmem:[%s3 + $0x58] sm:$0xff]
        %v614 = vld [vmem:[%s3 + $0x60] sm:$0xff]
        %v615 = vld [vmem:[%s3 + $0x68] sm:$0xff]
        %v616 = vld [vmem:[%s3 + $0x70] sm:$0xff]
        %v617 = vld [vmem:[%s3 + $0x78] sm:$0xff]
        %v618 = vld [vmem:[%s3 + $0x80] sm:$0xff]
        %v619 = vld [vmem:[%s3 + $0x88] sm:$0xff]
        %v620 = vld [vmem:[%s3 + $0x90] sm:$0xff]
        %v621 = vld [vmem:[%s3 + $0x98] sm:$0xff]
        %v622 = vld [vmem:[%s3 + $0xa0] sm:$0xff]
        %v623 = vld [vmem:[%s3 + $0xa8] sm:$0xff]
        %v624 = vld [vmem:[%s3 + $0xb0] sm:$0xff]
        %v625 = vld [vmem:[%s3 + $0xb8] sm:$0xff]
        %v626 = vld [vmem:[%s3 + $0xc0] sm:$0xff]
        %v627 = vld [vmem:[%s3 + $0xc8] sm:$0xff]
        %v628 = vld [vmem:[%s3 + $0xd0] sm:$0xff]
        %v629 = vld [vmem:[%s3 + $0xd8] sm:$0xff]
        %v630 = vld [vmem:[%s3 + $0xe0] sm:$0xff]
        %v631 = vld [vmem:[%s3 + $0xe8] sm:$0xff]
        %v632 = vld [vmem:[%s3 + $0xf0] sm:$0xff]
        %v633 = vld [vmem:[%s3 + $0xf8] sm:$0xff]
        %v634 = vld [vmem:[%s3 + $0x100] sm:$0xff]
        %v635 = vld [vmem:[%s3 + $0x108] sm:$0xff]
        %v636 = vld [vmem:[%s3 + $0x110] sm:$0xff]
        %v637 = vld [vmem:[%s3 + $0x118] sm:$0xff]
        %v638 = vld [vmem:[%s3 + $0x120] sm:$0xff]
        %v639 = vld [vmem:[%s3 + $0x128] sm:$0xff]
        %v640 = vld [vmem:[%s3 + $0x130] sm:$0xff]
        %v641 = vld [vmem:[%s3 + $0x138] sm:$0xff]
        %v642 = vld [vmem:[%s3 + $0x140] sm:$0xff]
        %v643 = vld [vmem:[%s3 + $0x148] sm:$0xff]
        %v644 = vld [vmem:[%s3 + $0x150] sm:$0xff]
        %v645 = vld [vmem:[%s3 + $0x158] sm:$0xff]
        %v646 = vld [vmem:[%s3 + $0x160] sm:$0xff]
        %v647 = vld [vmem:[%s3 + $0x168] sm:$0xff]
        %v648 = vld [vmem:[%s3 + $0x170] sm:$0xff]
        %v649 = vld [vmem:[%s3 + $0x178] sm:$0xff]
        %v650 = vld [vmem:[%s3 + $0x180] sm:$0xff]
        %v651 = vld [vmem:[%s3 + $0x188] sm:$0xff]
        %v652 = vld [vmem:[%s3 + $0x190] sm:$0xff]
        %v653 = vld [vmem:[%s3 + $0x198] sm:$0xff]
        %v654 = vld [vmem:[%s3 + $0x1a0] sm:$0xff]
        %v655 = vld [vmem:[%s3 + $0x1a8] sm:$0xff]
        %v656 = vld [vmem:[%s3 + $0x1b0] sm:$0xff]
        %v657 = vld [vmem:[%s3 + $0x1b8] sm:$0xff]
        %v658 = vld [vmem:[%s3 + $0x1c0] sm:$0xff]
        %v659 = vld [vmem:[%s3 + $0x1c8] sm:$0xff]
        %v660 = vld [vmem:[%s3 + $0x1d0] sm:$0xff]
        %v661 = vld [vmem:[%s3 + $0x1d8] sm:$0xff]
        %v662 = vld [vmem:[%s3 + $0x1e0] sm:$0xff]
        %v663 = vld [vmem:[%s3 + $0x1e8] sm:$0xff]
        %v664 = vld [vmem:[%s3 + $0x1f0] sm:$0xff]
        %v665 = vld [vmem:[%s3 + $0x1f8] sm:$0xff]
        %v666 = vld [vmem:[%s4] sm:$0x3]
        %v668 = vlaneseq
        %v669 = vshrl.u32 %v668, 7
        %v670 = vsub.s32 0, %v669
        %v671 = vrot.slane %v666, %v670
        %v672 = vlaneseq
        %v673 = vshrl.u32 %v672, 7
        %v674 = vsub.s32 1, %v673
        %v675 = vrot.slane %v666, %v674
        %678 = vmatprep.subr.mxu0 %v603
        %679 = vmatpush1.msra.mxu0 %v602
        %680 = vmatprep.subr.mxu0 %v605
        %681 = vmatpush1.msra.mxu0 %v604
        %682 = vmatprep.subr.mxu0 %v607
        %683 = vmatpush1.msra.mxu0 %v606
        %684 = vmatprep.subr.mxu0 %v609
        %685 = vmatpush1.msra.mxu0 %v608
        %686 = vmatprep.subr.mxu0 %v611
        %687 = vmatpush1.msra.mxu0 %v610
        %688 = vmatprep.subr.mxu0 %v613
        %689 = vmatpush1.msra.mxu0 %v612
        %690 = vmatprep.subr.mxu0 %v615
        %691 = vmatpush1.msra.mxu0 %v614
        %692 = vmatprep.subr.mxu0 %v617
        %693 = vmatpush1.msra.mxu0 %v616
        %694 = vmatprep.subr.mxu0 %v619
        %695 = vmatpush1.msra.mxu0 %v618
        %696 = vmatprep.subr.mxu0 %v621
        %697 = vmatpush1.msra.mxu0 %v620
        %698 = vmatprep.subr.mxu0 %v623
        %699 = vmatpush1.msra.mxu0 %v622
        %700 = vmatprep.subr.mxu0 %v625
        %701 = vmatpush1.msra.mxu0 %v624
        %702 = vmatprep.subr.mxu0 %v627
        %703 = vmatpush1.msra.mxu0 %v626
        %704 = vmatprep.subr.mxu0 %v629
        %705 = vmatpush1.msra.mxu0 %v628
        %706 = vmatprep.subr.mxu0 %v631
        %707 = vmatpush1.msra.mxu0 %v630
        %708 = vmatprep.subr.mxu0 %v633
        %709 = vmatpush1.msra.mxu0 %v632
        %710 = vmatprep.subr.mxu0 %v635
        %711 = vmatpush1.msra.mxu0 %v634
        %712 = vmatprep.subr.mxu0 %v637
        %713 = vmatpush1.msra.mxu0 %v636
        %714 = vmatprep.subr.mxu0 %v639
        %715 = vmatpush1.msra.mxu0 %v638
        %716 = vmatprep.subr.mxu0 %v641
        %717 = vmatpush1.msra.mxu0 %v640
        %718 = vmatprep.subr.mxu0 %v643
        %719 = vmatpush1.msra.mxu0 %v642
        %720 = vmatprep.subr.mxu0 %v645
        %721 = vmatpush1.msra.mxu0 %v644
        %722 = vmatprep.subr.mxu0 %v647
        %723 = vmatpush1.msra.mxu0 %v646
        %724 = vmatprep.subr.mxu0 %v649
        %725 = vmatpush1.msra.mxu0 %v648
        %726 = vmatprep.subr.mxu0 %v651
        %727 = vmatpush1.msra.mxu0 %v650
        %728 = vmatprep.subr.mxu0 %v653
        %729 = vmatpush1.msra.mxu0 %v652
        %730 = vmatprep.subr.mxu0 %v655
        %731 = vmatpush1.msra.mxu0 %v654
        %732 = vmatprep.subr.mxu0 %v657
        %733 = vmatpush1.msra.mxu0 %v656
        %734 = vmatprep.subr.mxu0 %v659
        %735 = vmatpush1.msra.mxu0 %v658
        %736 = vmatprep.subr.mxu0 %v661
        %737 = vmatpush1.msra.mxu0 %v660
        %738 = vmatprep.subr.mxu0 %v663
        %739 = vmatpush1.msra.mxu0 %v662
        %740 = vmatprep.subr.mxu0 %v665
        %741 = vmatpush1.msra.mxu0 %v664
        %742 = vmatprep.mubr.f32.mxu0 %v571
        %743 = vmatmul.mubr.f32.gmra.mrb[0].mxu0 %v570
        %v744 = vpop.f32.mrb[0].mxu0
        %v745 = vadd.f32 %v671, %v744
        %v746 = vpop.f32.mrb[0].mxu0
        %v747 = vadd.f32 %v675, %v746
        %748 = vmatprep.mubr.f32.mxu0 %v573
        %749 = vmatmul.mubr.f32.gmra.mrb[0].mxu0 %v572
        %v750 = vpop.f32.mrb[0].mxu0
        %v751 = vadd.f32 %v671, %v750
        %v752 = vpop.f32.mrb[0].mxu0
        %v753 = vadd.f32 %v675, %v752
        %754 = vmatprep.mubr.f32.mxu0 %v575
        %755 = vmatmul.mubr.f32.gmra.mrb[0].mxu0 %v574
        %v756 = vpop.f32.mrb[0].mxu0
        %v757 = vadd.f32 %v671, %v756
        %v758 = vpop.f32.mrb[0].mxu0
        %v759 = vadd.f32 %v675, %v758
        %760 = vmatprep.mubr.f32.mxu0 %v577
        %761 = vmatmul.mubr.f32.gmra.mrb[0].mxu0 %v576
        %v762 = vpop.f32.mrb[0].mxu0
        %v763 = vadd.f32 %v671, %v762
        %v764 = vpop.f32.mrb[0].mxu0
        %v765 = vadd.f32 %v675, %v764
        %766 = vmatprep.mubr.f32.mxu0 %v579
        %767 = vmatmul.mubr.f32.gmra.mrb[0].mxu0 %v578
        %v768 = vpop.f32.mrb[0].mxu0
        %v769 = vadd.f32 %v671, %v768
        %v770 = vpop.f32.mrb[0].mxu0
        %v771 = vadd.f32 %v675, %v770
        %772 = vmatprep.mubr.f32.mxu0 %v581
        %773 = vmatmul.mubr.f32.gmra.mrb[0].mxu0 %v580
        %v774 = vpop.f32.mrb[0].mxu0
        %v775 = vadd.f32 %v671, %v774
        %v776 = vpop.f32.mrb[0].mxu0
        %v777 = vadd.f32 %v675, %v776
        %778 = vmatprep.mubr.f32.mxu0 %v583
        %779 = vmatmul.mubr.f32.gmra.mrb[0].mxu0 %v582
        %v780 = vpop.f32.mrb[0].mxu0
        %v781 = vadd.f32 %v671, %v780
        %v782 = vpop.f32.mrb[0].mxu0
        %v783 = vadd.f32 %v675, %v782
        %784 = vmatprep.mubr.f32.mxu0 %v585
        %785 = vmatmul.mubr.f32.gmra.mrb[0].mxu0 %v584
        %v786 = vpop.f32.mrb[0].mxu0
        %v787 = vadd.f32 %v671, %v786
        %v788 = vpop.f32.mrb[0].mxu0
        %v789 = vadd.f32 %v675, %v788
        %790 = vmatprep.mubr.f32.mxu0 %v587
        %791 = vmatmul.mubr.f32.gmra.mrb[0].mxu0 %v586
        %v792 = vpop.f32.mrb[0].mxu0
        %v793 = vadd.f32 %v671, %v792
        %v794 = vpop.f32.mrb[0].mxu0
        %v795 = vadd.f32 %v675, %v794
        %796 = vmatprep.mubr.f32.mxu0 %v589
        %797 = vmatmul.mubr.f32.gmra.mrb[0].mxu0 %v588
        %v798 = vpop.f32.mrb[0].mxu0
        %v799 = vadd.f32 %v671, %v798
        %v800 = vpop.f32.mrb[0].mxu0
        %v801 = vadd.f32 %v675, %v800
        %802 = vmatprep.mubr.f32.mxu0 %v591
        %803 = vmatmul.mubr.f32.gmra.mrb[0].mxu0 %v590
        %v804 = vpop.f32.mrb[0].mxu0
        %v805 = vadd.f32 %v671, %v804
        %v806 = vpop.f32.mrb[0].mxu0
        %v807 = vadd.f32 %v675, %v806
        %808 = vmatprep.mubr.f32.mxu0 %v593
        %809 = vmatmul.mubr.f32.gmra.mrb[0].mxu0 %v592
        %v810 = vpop.f32.mrb[0].mxu0
        %v811 = vadd.f32 %v671, %v810
        %v812 = vpop.f32.mrb[0].mxu0
        %v813 = vadd.f32 %v675, %v812
        %814 = vmatprep.mubr.f32.mxu0 %v595
        %815 = vmatmul.mubr.f32.gmra.mrb[0].mxu0 %v594
        %v816 = vpop.f32.mrb[0].mxu0
        %v817 = vadd.f32 %v671, %v816
        %v818 = vpop.f32.mrb[0].mxu0
        %v819 = vadd.f32 %v675, %v818
        %820 = vmatprep.mubr.f32.mxu0 %v597
        %821 = vmatmul.mubr.f32.gmra.mrb[0].mxu0 %v596
        %v822 = vpop.f32.mrb[0].mxu0
        %v823 = vadd.f32 %v671, %v822
        %v824 = vpop.f32.mrb[0].mxu0
        %v825 = vadd.f32 %v675, %v824
        %826 = vmatprep.mubr.f32.mxu0 %v599
        %827 = vmatmul.mubr.f32.gmra.mrb[0].mxu0 %v598
        %v828 = vpop.f32.mrb[0].mxu0
        %v829 = vadd.f32 %v671, %v828
        %v830 = vpop.f32.mrb[0].mxu0
        %v831 = vadd.f32 %v675, %v830
        %832 = vmatprep.mubr.f32.mxu0 %v601
        %833 = vmatmul.mubr.f32.gmra.mrb[0].mxu0 %v600
        %v834 = vpop.f32.mrb[0].mxu0
        %v835 = vadd.f32 %v671, %v834
        %v836 = vpop.f32.mrb[0].mxu0
        %v837 = vadd.f32 %v675, %v836
        %838 = vdwg.mxu0
        %v839 = vmax.f32 %v745, 0.0
        %v840 = vmax.f32 %v747, 0.0
        %v841 = vmax.f32 %v751, 0.0
        %v842 = vmax.f32 %v753, 0.0
        %v843 = vmax.f32 %v757, 0.0
        %v844 = vmax.f32 %v759, 0.0
        %v845 = vmax.f32 %v763, 0.0
        %v846 = vmax.f32 %v765, 0.0
        %v847 = vmax.f32 %v769, 0.0
        %v848 = vmax.f32 %v771, 0.0
        %v849 = vmax.f32 %v775, 0.0
        %v850 = vmax.f32 %v777, 0.0
        %v851 = vmax.f32 %v781, 0.0
        %v852 = vmax.f32 %v783, 0.0
        %v853 = vmax.f32 %v787, 0.0
        %v854 = vmax.f32 %v789, 0.0
        %v855 = vmax.f32 %v793, 0.0
        %v856 = vmax.f32 %v795, 0.0
        %v857 = vmax.f32 %v799, 0.0
        %v858 = vmax.f32 %v801, 0.0
        %v859 = vmax.f32 %v805, 0.0
        %v860 = vmax.f32 %v807, 0.0
        %v861 = vmax.f32 %v811, 0.0
        %v862 = vmax.f32 %v813, 0.0
        %v863 = vmax.f32 %v817, 0.0
        %v864 = vmax.f32 %v819, 0.0
        %v865 = vmax.f32 %v823, 0.0
        %v866 = vmax.f32 %v825, 0.0
        %v867 = vmax.f32 %v829, 0.0
        %v868 = vmax.f32 %v831, 0.0
        %v869 = vmax.f32 %v835, 0.0
        %v870 = vmax.f32 %v837, 0.0
        %v871 = vld [vmem:[%s5] sm:$0xff]
        %v872 = vld [vmem:[%s5 + $0x8] sm:$0xff]
        %v873 = vld [vmem:[%s5 + $0x10] sm:$0xff]
        %v874 = vld [vmem:[%s5 + $0x18] sm:$0xff]
        %v875 = vld [vmem:[%s5 + $0x20] sm:$0xff]
        %v876 = vld [vmem:[%s5 + $0x28] sm:$0xff]
        %v877 = vld [vmem:[%s5 + $0x30] sm:$0xff]
        %v878 = vld [vmem:[%s5 + $0x38] sm:$0xff]
        %v879 = vld [vmem:[%s5 + $0x40] sm:$0xff]
        %v880 = vld [vmem:[%s5 + $0x48] sm:$0xff]
        %v881 = vld [vmem:[%s5 + $0x50] sm:$0xff]
        %v882 = vld [vmem:[%s5 + $0x58] sm:$0xff]
        %v883 = vld [vmem:[%s5 + $0x60] sm:$0xff]
        %v884 = vld [vmem:[%s5 + $0x68] sm:$0xff]
        %v885 = vld [vmem:[%s5 + $0x70] sm:$0xff]
        %v886 = vld [vmem:[%s5 + $0x78] sm:$0xff]
        %v887 = vld [vmem:[%s5 + $0x80] sm:$0xff]
        %v888 = vld [vmem:[%s5 + $0x88] sm:$0xff]
        %v889 = vld [vmem:[%s5 + $0x90] sm:$0xff]
        %v890 = vld [vmem:[%s5 + $0x98] sm:$0xff]
        %v891 = vld [vmem:[%s5 + $0xa0] sm:$0xff]
        %v892 = vld [vmem:[%s5 + $0xa8] sm:$0xff]
        %v893 = vld [vmem:[%s5 + $0xb0] sm:$0xff]
        %v894 = vld [vmem:[%s5 + $0xb8] sm:$0xff]
        %v895 = vld [vmem:[%s5 + $0xc0] sm:$0xff]
        %v896 = vld [vmem:[%s5 + $0xc8] sm:$0xff]
        %v897 = vld [vmem:[%s5 + $0xd0] sm:$0xff]
        %v898 = vld [vmem:[%s5 + $0xd8] sm:$0xff]
        %v899 = vld [vmem:[%s5 + $0xe0] sm:$0xff]
        %v900 = vld [vmem:[%s5 + $0xe8] sm:$0xff]
        %v901 = vld [vmem:[%s5 + $0xf0] sm:$0xff]
        %v902 = vld [vmem:[%s5 + $0xf8] sm:$0xff]
        %v903 = vld [vmem:[%s6] sm:$0x1]
        %v905 = vlaneseq
        %v906 = vshrl.u32 %v905, 7
        %v907 = vsub.s32 0, %v906
        %v908 = vrot.slane %v903, %v907
        %910 = vmatprep.subr.mxu0 0.0
        %911 = vmatpush1.msra.mxu0 %v871
        %912 = vmatprep.subr.mxu0 0.0
        %913 = vmatpush1.msra.mxu0 %v872
        %914 = vmatprep.subr.mxu0 0.0
        %915 = vmatpush1.msra.mxu0 %v873
        %916 = vmatprep.subr.mxu0 0.0
        %917 = vmatpush1.msra.mxu0 %v874
        %918 = vmatprep.subr.mxu0 0.0
        %919 = vmatpush1.msra.mxu0 %v875
        %920 = vmatprep.subr.mxu0 0.0
        %921 = vmatpush1.msra.mxu0 %v876
        %922 = vmatprep.subr.mxu0 0.0
        %923 = vmatpush1.msra.mxu0 %v877
        %924 = vmatprep.subr.mxu0 0.0
        %925 = vmatpush1.msra.mxu0 %v878
        %926 = vmatprep.subr.mxu0 0.0
        %927 = vmatpush1.msra.mxu0 %v879
        %928 = vmatprep.subr.mxu0 0.0
        %929 = vmatpush1.msra.mxu0 %v880
        %930 = vmatprep.subr.mxu0 0.0
        %931 = vmatpush1.msra.mxu0 %v881
        %932 = vmatprep.subr.mxu0 0.0
        %933 = vmatpush1.msra.mxu0 %v882
        %934 = vmatprep.subr.mxu0 0.0
        %935 = vmatpush1.msra.mxu0 %v883
        %936 = vmatprep.subr.mxu0 0.0
        %937 = vmatpush1.msra.mxu0 %v884
        %938 = vmatprep.subr.mxu0 0.0
        %939 = vmatpush1.msra.mxu0 %v885
        %940 = vmatprep.subr.mxu0 0.0
        %941 = vmatpush1.msra.mxu0 %v886
        %942 = vmatprep.subr.mxu0 0.0
        %943 = vmatpush1.msra.mxu0 %v887
        %944 = vmatprep.subr.mxu0 0.0
        %945 = vmatpush1.msra.mxu0 %v888
        %946 = vmatprep.subr.mxu0 0.0
        %947 = vmatpush1.msra.mxu0 %v889
        %948 = vmatprep.subr.mxu0 0.0
        %949 = vmatpush1.msra.mxu0 %v890
        %950 = vmatprep.subr.mxu0 0.0
        %951 = vmatpush1.msra.mxu0 %v891
        %952 = vmatprep.subr.mxu0 0.0
        %953 = vmatpush1.msra.mxu0 %v892
        %954 = vmatprep.subr.mxu0 0.0
        %955 = vmatpush1.msra.mxu0 %v893
        %956 = vmatprep.subr.mxu0 0.0
        %957 = vmatpush1.msra.mxu0 %v894
        %958 = vmatprep.subr.mxu0 0.0
        %959 = vmatpush1.msra.mxu0 %v895
        %960 = vmatprep.subr.mxu0 0.0
        %961 = vmatpush1.msra.mxu0 %v896
        %962 = vmatprep.subr.mxu0 0.0
        %963 = vmatpush1.msra.mxu0 %v897
        %964 = vmatprep.subr.mxu0 0.0
        %965 = vmatpush1.msra.mxu0 %v898
        %966 = vmatprep.subr.mxu0 0.0
        %967 = vmatpush1.msra.mxu0 %v899
        %968 = vmatprep.subr.mxu0 0.0
        %969 = vmatpush1.msra.mxu0 %v900
        %970 = vmatprep.subr.mxu0 0.0
        %971 = vmatpush1.msra.mxu0 %v901
        %972 = vmatprep.subr.mxu0 0.0
        %973 = vmatpush1.msra.mxu0 %v902
        %974 = vmatprep.mubr.f32.mxu0 %v840
        %975 = vmatmul.mubr.f32.gmra.mrb[0].mxu0 %v839
        %v976 = vpop.f32.mrb[0].mxu0
        %v977 = vadd.f32 %v908, %v976
        %v978 = vpop.f32.mrb[0].mxu0
        %979 = vmatprep.mubr.f32.mxu0 %v842
        %980 = vmatmul.mubr.f32.gmra.mrb[0].mxu0 %v841
        %v981 = vpop.f32.mrb[0].mxu0
        %v982 = vadd.f32 %v908, %v981
        %v983 = vpop.f32.mrb[0].mxu0
        %984 = vmatprep.mubr.f32.mxu0 %v844
        %985 = vmatmul.mubr.f32.gmra.mrb[0].mxu0 %v843
        %v986 = vpop.f32.mrb[0].mxu0
        %v987 = vadd.f32 %v908, %v986
        %v988 = vpop.f32.mrb[0].mxu0
        %989 = vmatprep.mubr.f32.mxu0 %v846
        %990 = vmatmul.mubr.f32.gmra.mrb[0].mxu0 %v845
        %v991 = vpop.f32.mrb[0].mxu0
        %v992 = vadd.f32 %v908, %v991
        %v993 = vpop.f32.mrb[0].mxu0
        %994 = vmatprep.mubr.f32.mxu0 %v848
        %995 = vmatmul.mubr.f32.gmra.mrb[0].mxu0 %v847
        %v996 = vpop.f32.mrb[0].mxu0
        %v997 = vadd.f32 %v908, %v996
        %v998 = vpop.f32.mrb[0].mxu0
        %999 = vmatprep.mubr.f32.mxu0 %v850
        %1000 = vmatmul.mubr.f32.gmra.mrb[0].mxu0 %v849
        %v1001 = vpop.f32.mrb[0].mxu0
        %v1002 = vadd.f32 %v908, %v1001
        %v1003 = vpop.f32.mrb[0].mxu0
        %1004 = vmatprep.mubr.f32.mxu0 %v852
        %1005 = vmatmul.mubr.f32.gmra.mrb[0].mxu0 %v851
        %v1006 = vpop.f32.mrb[0].mxu0
        %v1007 = vadd.f32 %v908, %v1006
        %v1008 = vpop.f32.mrb[0].mxu0
        %1009 = vmatprep.mubr.f32.mxu0 %v854
        %1010 = vmatmul.mubr.f32.gmra.mrb[0].mxu0 %v853
        %v1011 = vpop.f32.mrb[0].mxu0
        %v1012 = vadd.f32 %v908, %v1011
        %v1013 = vpop.f32.mrb[0].mxu0
        %1014 = vmatprep.mubr.f32.mxu0 %v856
        %1015 = vmatmul.mubr.f32.gmra.mrb[0].mxu0 %v855
        %v1016 = vpop.f32.mrb[0].mxu0
        %v1017 = vadd.f32 %v908, %v1016
        %v1018 = vpop.f32.mrb[0].mxu0
        %1019 = vmatprep.mubr.f32.mxu0 %v858
        %1020 = vmatmul.mubr.f32.gmra.mrb[0].mxu0 %v857
        %v1021 = vpop.f32.mrb[0].mxu0
        %v1022 = vadd.f32 %v908, %v1021
        %v1023 = vpop.f32.mrb[0].mxu0
        %1024 = vmatprep.mubr.f32.mxu0 %v860
        %1025 = vmatmul.mubr.f32.gmra.mrb[0].mxu0 %v859
        %v1026 = vpop.f32.mrb[0].mxu0
        %v1027 = vadd.f32 %v908, %v1026
        %v1028 = vpop.f32.mrb[0].mxu0
        %1029 = vmatprep.mubr.f32.mxu0 %v862
        %1030 = vmatmul.mubr.f32.gmra.mrb[0].mxu0 %v861
        %v1031 = vpop.f32.mrb[0].mxu0
        %v1032 = vadd.f32 %v908, %v1031
        %v1033 = vpop.f32.mrb[0].mxu0
        %1034 = vmatprep.mubr.f32.mxu0 %v864
        %1035 = vmatmul.mubr.f32.gmra.mrb[0].mxu0 %v863
        %v1036 = vpop.f32.mrb[0].mxu0
        %v1037 = vadd.f32 %v908, %v1036
        %v1038 = vpop.f32.mrb[0].mxu0
        %1039 = vmatprep.mubr.f32.mxu0 %v866
        %1040 = vmatmul.mubr.f32.gmra.mrb[0].mxu0 %v865
        %v1041 = vpop.f32.mrb[0].mxu0
        %v1042 = vadd.f32 %v908, %v1041
        %v1043 = vpop.f32.mrb[0].mxu0
        %1044 = vmatprep.mubr.f32.mxu0 %v868
        %1045 = vmatmul.mubr.f32.gmra.mrb[0].mxu0 %v867
        %v1046 = vpop.f32.mrb[0].mxu0
        %v1047 = vadd.f32 %v908, %v1046
        %v1048 = vpop.f32.mrb[0].mxu0
        %1049 = vmatprep.mubr.f32.mxu0 %v870
        %1050 = vmatmul.mubr.f32.gmra.mrb[0].mxu0 %v869
        %v1051 = vpop.f32.mrb[0].mxu0
        %v1052 = vadd.f32 %v908, %v1051
        %v1053 = vpop.f32.mrb[0].mxu0
        %1054 = vdwg.mxu0
        %v1055 = vmax.f32 %v977, 0.0
        %v1056 = vmax.f32 %v982, 0.0
        %v1057 = vmax.f32 %v987, 0.0
        %v1058 = vmax.f32 %v992, 0.0
        %v1059 = vmax.f32 %v997, 0.0
        %v1060 = vmax.f32 %v1002, 0.0
        %v1061 = vmax.f32 %v1007, 0.0
        %v1062 = vmax.f32 %v1012, 0.0
        %v1063 = vmax.f32 %v1017, 0.0
        %v1064 = vmax.f32 %v1022, 0.0
        %v1065 = vmax.f32 %v1027, 0.0
        %v1066 = vmax.f32 %v1032, 0.0
        %v1067 = vmax.f32 %v1037, 0.0
        %v1068 = vmax.f32 %v1042, 0.0
        %v1069 = vmax.f32 %v1047, 0.0
        %v1070 = vmax.f32 %v1052, 0.0
        %v1071 = vld [vmem:[%s7] sm:$0xff]
        %v1072 = vld [vmem:[%s7 + $0x8] sm:$0xff]
        %v1073 = vld [vmem:[%s7 + $0x10] sm:$0xff]
        %v1074 = vld [vmem:[%s7 + $0x18] sm:$0xff]
        %v1075 = vld [vmem:[%s7 + $0x20] sm:$0xff]
        %v1076 = vld [vmem:[%s7 + $0x28] sm:$0xff]
        %v1077 = vld [vmem:[%s7 + $0x30] sm:$0xff]
        %v1078 = vld [vmem:[%s7 + $0x38] sm:$0xff]
        %v1079 = vld [vmem:[%s7 + $0x40] sm:$0xff]
        %v1080 = vld [vmem:[%s7 + $0x48] sm:$0xff]
        %v1081 = vld [vmem:[%s7 + $0x50] sm:$0xff]
        %v1082 = vld [vmem:[%s7 + $0x58] sm:$0xff]
        %v1083 = vld [vmem:[%s7 + $0x60] sm:$0xff]
        %v1084 = vld [vmem:[%s7 + $0x68] sm:$0xff]
        %v1085 = vld [vmem:[%s7 + $0x70] sm:$0xff]
        %v1086 = vld [vmem:[%s7 + $0x78] sm:$0xff]
        %v1087 = vld [vmem:[%s8] sm:$0x1]
        %v1089 = vlaneseq
        %v1090 = vshrl.u32 %v1089, 7
        %v1091 = vsub.s32 0, %v1090
        %v1092 = vrot.slane %v1087, %v1091
        %1094 = vmatprep.subr.mxu0 0.0
        %1095 = vmatpush1.msra.mxu0 %v1071
        %1096 = vmatprep.subr.mxu0 0.0
        %1097 = vmatpush1.msra.mxu0 %v1072
        %1098 = vmatprep.subr.mxu0 0.0
        %1099 = vmatpush1.msra.mxu0 %v1073
        %1100 = vmatprep.subr.mxu0 0.0
        %1101 = vmatpush1.msra.mxu0 %v1074
        %1102 = vmatprep.subr.mxu0 0.0
        %1103 = vmatpush1.msra.mxu0 %v1075
        %1104 = vmatprep.subr.mxu0 0.0
        %1105 = vmatpush1.msra.mxu0 %v1076
        %1106 = vmatprep.subr.mxu0 0.0
        %1107 = vmatpush1.msra.mxu0 %v1077
        %1108 = vmatprep.subr.mxu0 0.0
        %1109 = vmatpush1.msra.mxu0 %v1078
        %1110 = vmatprep.subr.mxu0 0.0
        %1111 = vmatpush1.msra.mxu0 %v1079
        %1112 = vmatprep.subr.mxu0 0.0
        %1113 = vmatpush1.msra.mxu0 %v1080
        %1114 = vmatprep.subr.mxu0 0.0
        %1115 = vmatpush1.msra.mxu0 %v1081
        %1116 = vmatprep.subr.mxu0 0.0
        %1117 = vmatpush1.msra.mxu0 %v1082
        %1118 = vmatprep.subr.mxu0 0.0
        %1119 = vmatpush1.msra.mxu0 %v1083
        %1120 = vmatprep.subr.mxu0 0.0
        %1121 = vmatpush1.msra.mxu0 %v1084
        %1122 = vmatprep.subr.mxu0 0.0
        %1123 = vmatpush1.msra.mxu0 %v1085
        %1124 = vmatprep.subr.mxu0 0.0
        %1125 = vmatpush1.msra.mxu0 %v1086
        %1126 = vmatprep.subr.mxu0 0.0
        %1127 = vmatpush1.msra.mxu0 0.0
        %1128 = vmatprep.subr.mxu0 0.0
        %1129 = vmatpush1.msra.mxu0 0.0
        %1130 = vmatprep.subr.mxu0 0.0
        %1131 = vmatpush1.msra.mxu0 0.0
        %1132 = vmatprep.subr.mxu0 0.0
        %1133 = vmatpush1.msra.mxu0 0.0
        %1134 = vmatprep.subr.mxu0 0.0
        %1135 = vmatpush1.msra.mxu0 0.0
        %1136 = vmatprep.subr.mxu0 0.0
        %1137 = vmatpush1.msra.mxu0 0.0
        %1138 = vmatprep.subr.mxu0 0.0
        %1139 = vmatpush1.msra.mxu0 0.0
        %1140 = vmatprep.subr.mxu0 0.0
        %1141 = vmatpush1.msra.mxu0 0.0
        %1142 = vmatprep.subr.mxu0 0.0
        %1143 = vmatpush1.msra.mxu0 0.0
        %1144 = vmatprep.subr.mxu0 0.0
        %1145 = vmatpush1.msra.mxu0 0.0
        %1146 = vmatprep.subr.mxu0 0.0
        %1147 = vmatpush1.msra.mxu0 0.0
        %1148 = vmatprep.subr.mxu0 0.0
        %1149 = vmatpush1.msra.mxu0 0.0
        %1150 = vmatprep.subr.mxu0 0.0
        %1151 = vmatpush1.msra.mxu0 0.0
        %1152 = vmatprep.subr.mxu0 0.0
        %1153 = vmatpush1.msra.mxu0 0.0
        %1154 = vmatprep.subr.mxu0 0.0
        %1155 = vmatpush1.msra.mxu0 0.0
        %1156 = vmatprep.subr.mxu0 0.0
        %1157 = vmatpush1.msra.mxu0 0.0
        %1158 = vmatprep.mubr.f32.mxu0 0.0
        %1159 = vmatmul.mubr.f32.gmra.mrb[0].mxu0 %v1055
        %v1160 = vpop.f32.mrb[0].mxu0
        %v1161 = vadd.f32 %v1092, %v1160
        %v1162 = vpop.f32.mrb[0].mxu0
        %1163 = vmatprep.mubr.f32.mxu0 0.0
        %1164 = vmatmul.mubr.f32.gmra.mrb[0].mxu0 %v1056
        %v1165 = vpop.f32.mrb[0].mxu0
        %v1166 = vadd.f32 %v1092, %v1165
        %v1167 = vpop.f32.mrb[0].mxu0
        %1168 = vmatprep.mubr.f32.mxu0 0.0
        %1169 = vmatmul.mubr.f32.gmra.mrb[0].mxu0 %v1057
        %v1170 = vpop.f32.mrb[0].mxu0
        %v1171 = vadd.f32 %v1092, %v1170
        %v1172 = vpop.f32.mrb[0].mxu0
        %1173 = vmatprep.mubr.f32.mxu0 0.0
        %1174 = vmatmul.mubr.f32.gmra.mrb[0].mxu0 %v1058
        %v1175 = vpop.f32.mrb[0].mxu0
        %v1176 = vadd.f32 %v1092, %v1175
        %v1177 = vpop.f32.mrb[0].mxu0
        %1178 = vmatprep.mubr.f32.mxu0 0.0
        %1179 = vmatmul.mubr.f32.gmra.mrb[0].mxu0 %v1059
        %v1180 = vpop.f32.mrb[0].mxu0
        %v1181 = vadd.f32 %v1092, %v1180
        %v1182 = vpop.f32.mrb[0].mxu0
        %1183 = vmatprep.mubr.f32.mxu0 0.0
        %1184 = vmatmul.mubr.f32.gmra.mrb[0].mxu0 %v1060
        %v1185 = vpop.f32.mrb[0].mxu0
        %v1186 = vadd.f32 %v1092, %v1185
        %v1187 = vpop.f32.mrb[0].mxu0
        %1188 = vmatprep.mubr.f32.mxu0 0.0
        %1189 = vmatmul.mubr.f32.gmra.mrb[0].mxu0 %v1061
        %v1190 = vpop.f32.mrb[0].mxu0
        %v1191 = vadd.f32 %v1092, %v1190
        %v1192 = vpop.f32.mrb[0].mxu0
        %1193 = vmatprep.mubr.f32.mxu0 0.0
        %1194 = vmatmul.mubr.f32.gmra.mrb[0].mxu0 %v1062
        %v1195 = vpop.f32.mrb[0].mxu0
        %v1196 = vadd.f32 %v1092, %v1195
        %v1197 = vpop.f32.mrb[0].mxu0
        %1198 = vmatprep.mubr.f32.mxu0 0.0
        %1199 = vmatmul.mubr.f32.gmra.mrb[0].mxu0 %v1063
        %v1200 = vpop.f32.mrb[0].mxu0
        %v1201 = vadd.f32 %v1092, %v1200
        %v1202 = vpop.f32.mrb[0].mxu0
        %1203 = vmatprep.mubr.f32.mxu0 0.0
        %1204 = vmatmul.mubr.f32.gmra.mrb[0].mxu0 %v1064
        %v1205 = vpop.f32.mrb[0].mxu0
        %v1206 = vadd.f32 %v1092, %v1205
        %v1207 = vpop.f32.mrb[0].mxu0
        %1208 = vmatprep.mubr.f32.mxu0 0.0
        %1209 = vmatmul.mubr.f32.gmra.mrb[0].mxu0 %v1065
        %v1210 = vpop.f32.mrb[0].mxu0
        %v1211 = vadd.f32 %v1092, %v1210
        %v1212 = vpop.f32.mrb[0].mxu0
        %1213 = vmatprep.mubr.f32.mxu0 0.0
        %1214 = vmatmul.mubr.f32.gmra.mrb[0].mxu0 %v1066
        %v1215 = vpop.f32.mrb[0].mxu0
        %v1216 = vadd.f32 %v1092, %v1215
        %v1217 = vpop.f32.mrb[0].mxu0
        %1218 = vmatprep.mubr.f32.mxu0 0.0
        %1219 = vmatmul.mubr.f32.gmra.mrb[0].mxu0 %v1067
        %v1220 = vpop.f32.mrb[0].mxu0
        %v1221 = vadd.f32 %v1092, %v1220
        %v1222 = vpop.f32.mrb[0].mxu0
        %1223 = vmatprep.mubr.f32.mxu0 0.0
        %1224 = vmatmul.mubr.f32.gmra.mrb[0].mxu0 %v1068
        %v1225 = vpop.f32.mrb[0].mxu0
        %v1226 = vadd.f32 %v1092, %v1225
        %v1227 = vpop.f32.mrb[0].mxu0
        %1228 = vmatprep.mubr.f32.mxu0 0.0
        %1229 = vmatmul.mubr.f32.gmra.mrb[0].mxu0 %v1069
        %v1230 = vpop.f32.mrb[0].mxu0
        %v1231 = vadd.f32 %v1092, %v1230
        %v1232 = vpop.f32.mrb[0].mxu0
        %1233 = vmatprep.mubr.f32.mxu0 0.0
        %1234 = vmatmul.mubr.f32.gmra.mrb[0].mxu0 %v1070
        %v1235 = vpop.f32.mrb[0].mxu0
        %v1236 = vadd.f32 %v1092, %v1235
        %v1237 = vpop.f32.mrb[0].mxu0
        %1238 = vdwg.mxu0
        %1239 = vst [vmem:[%s347] sm:$0xff] %v1161
        %1240 = vst [vmem:[%s347 + $0x8] sm:$0xff] %v1166
        %1241 = vst [vmem:[%s347 + $0x10] sm:$0xff] %v1171
        %1242 = vst [vmem:[%s347 + $0x18] sm:$0xff] %v1176
        %1243 = vst [vmem:[%s347 + $0x20] sm:$0xff] %v1181
        %1244 = vst [vmem:[%s347 + $0x28] sm:$0xff] %v1186
        %1245 = vst [vmem:[%s347 + $0x30] sm:$0xff] %v1191
        %1246 = vst [vmem:[%s347 + $0x38] sm:$0xff] %v1196
        %1247 = vst [vmem:[%s347 + $0x40] sm:$0xff] %v1201
        %1248 = vst [vmem:[%s347 + $0x48] sm:$0xff] %v1206
        %1249 = vst [vmem:[%s347 + $0x50] sm:$0xff] %v1211
        %1250 = vst [vmem:[%s347 + $0x58] sm:$0xff] %v1216
        %1251 = vst [vmem:[%s347 + $0x60] sm:$0xff] %v1221
        %1252 = vst [vmem:[%s347 + $0x68] sm:$0xff] %v1226
        %1253 = vst [vmem:[%s347 + $0x70] sm:$0xff] %v1231
        %1254 = vst [vmem:[%s347 + $0x78] sm:$0xff] %v1236
        %s1255 = smul.u32 16, %s21
        %p1256 = scmp.lt.s32.totalorder %s1255, 31
        %s1257 = scalar_select %p1256, %s1255, 31
        %s1258 = smul.addr %s1257, 8
        %s1259 = scalar_lea.vmem %s9, %s1258
        // Predicated region
        $region61: #{dqcnn_forward_pallas.1} parent=55 // pred_check
          %p1260 = pneg %p233
        $region62: #{dqcnn_forward_pallas.1} parent=55 // pred_check_branch
          %1262 = sbr.rel (%p1260) target = $region64
        $region63: #{dqcnn_forward_pallas.1} parent=55 // pred_region
          %s1263 = smul.u32 16, %s21
        $region64: #{dqcnn_forward_pallas.1} parent=55 // pred_fallthru
          _
      $region56: #{dqcnn_forward_pallas.1} parent=5 // pred_fallthru
        _
      %p1264 = scmp.le.s32.totalorder 2, %s16
      // Predicated region
      $region65: #{dqcnn_forward_pallas.1} parent=5 // pred_check
        %p1265 = pneg %p1264
      $region66: #{dqcnn_forward_pallas.1} parent=5 // pred_check_branch
        %1267 = sbr.rel (%p1265) target = $region68
      $region67: #{dqcnn_forward_pallas.1} parent=5 // pred_region
        %s1268 = ssub.s32 %s16, 2
        // Predicated region
        $region69: #{dqcnn_forward_pallas.1} parent=67 // pred_check
          %p1269 = pneg %p239
        $region70: #{dqcnn_forward_pallas.1} parent=67 // pred_check_branch
          %1271 = sbr.rel (%p1269) target = $region72
        $region71: #{dqcnn_forward_pallas.1} parent=67 // pred_region
          %s1272 = smul.u32 16, %s22
          %p1273 = scmp.lt.s32.totalorder %s1272, 31
          %s1274 = scalar_select %p1273, %s1272, 31
          %s1275 = smul.addr %s1274, 8
          %s1276 = scalar_lea.vmem %s9, %s1275
        $region72: #{dqcnn_forward_pallas.1} parent=67 // pred_fallthru
          _
      $region68: #{dqcnn_forward_pallas.1} parent=5 // pred_fallthru
        _
    $region6: #{dqcnn_forward_pallas.1} parent=1 // loop_footer
      %s20 = sadd.s32 1, %s16
    $region7: #{dqcnn_forward_pallas.1} parent=1 // loop_footer_branch
      %15 = sbr.rel target = $region3
    $region8: #{dqcnn_forward_pallas.1} parent=1 // loop_exit
      _
    %1277 = vsyncpa [#allocation3], 1
    %s1278 = scalar_lea.sflag [#allocation3], 1
    %1279 = vsyncpa %s1278, 1

</llo_original>
